<compile_context>
chip_gen: v7x
topology: tpu7x:2x2x1
jax: 0.10.0
libtpu: 0.0.40
codegen_flags: <defaults>
</compile_context>

<pallas_src>
import jax
import jax.numpy as jnp
import numpy as np
from jax import lax
from jax.experimental import pallas as pl
from jax.experimental.pallas import tpu as pltpu


def _round_up(x, m):
    return (x + m - 1) // m * m


def _largest_tile(n, candidates):
    for c in candidates:
        if n % c == 0:
            return c
    return n


def _spec(block_shape, index_map, *, buffered=None):
    """BlockSpec helper; requests single/multi-buffering when supported."""
    if buffered is not None:
        try:
            return pl.BlockSpec(block_shape, index_map,
                                pipeline_mode=pl.Buffered(buffered))
        except (TypeError, AttributeError):
            pass
    return pl.BlockSpec(block_shape, index_map)


# ----------------------------------------------------------------------------
# Shared dense kernel: out = x @ w + b   (used for input projection and FC head)
# ----------------------------------------------------------------------------
def fc_kernel(x_ref, w_ref, b_ref, o_ref):
    o_ref[...] = (jnp.dot(x_ref[...], w_ref[...], preferred_element_type=jnp.float32)
                  + b_ref[...]).astype(o_ref.dtype)


def dense(x, w, b, out_dtype, *, vmem_budget=24 * 1024 * 1024):
    """Tiled matmul+bias. If the LHS is small, keep it VMEM-resident (single buffer)
    and tile only the output columns so W and the output stream from HBM exactly once."""
    M, K = x.shape
    N = w.shape[1]
    lhs_bytes = M * K * x.dtype.itemsize

    if lhs_bytes <= vmem_budget // 4:
        tn = _largest_tile(N, (1024, 512, 256, 128))
        return pl.pallas_call(
            fc_kernel,
            out_shape=jax.ShapeDtypeStruct((M, N), out_dtype),
            grid_spec=pltpu.PrefetchScalarGridSpec(
                num_scalar_prefetch=0,
                grid=(N // tn,),
                in_specs=[
                    _spec((M, K), lambda j: (0, 0), buffered=1),   # resident LHS
                    pl.BlockSpec((K, tn), lambda j: (0, j)),
                    pl.BlockSpec((1, tn), lambda j: (0, j)),
                ],
                out_specs=pl.BlockSpec((M, tn), lambda j: (0, j)),
            ),
            compiler_params=pltpu.CompilerParams(
                dimension_semantics=("parallel",)),
        )(x, w, b)

    # Fallback: 2-D tiling with the column axis OUTER so each W block is loaded once.
    tm = _largest_tile(M, (1024, 512, 256, 128, 64, 32, 16, 8))
    tn = _largest_tile(N, (1024, 512, 256, 128))
    return pl.pallas_call(
        fc_kernel,
        out_shape=jax.ShapeDtypeStruct((M, N), out_dtype),
        grid_spec=pltpu.PrefetchScalarGridSpec(
            num_scalar_prefetch=0,
            grid=(N // tn, M // tm),
            in_specs=[
                pl.BlockSpec((tm, K), lambda j, i: (i, 0)),
                pl.BlockSpec((K, tn), lambda j, i: (0, j)),
                pl.BlockSpec((1, tn), lambda j, i: (0, j)),
            ],
            out_specs=pl.BlockSpec((tm, tn), lambda j, i: (i, j)),
        ),
        compiler_params=pltpu.CompilerParams(
            dimension_semantics=("parallel", "parallel")),
    )(x, w, b)


# ----------------------------------------------------------------------------
# Kernel 1: serial LSTM recurrence.  Input projection (x@W_ih + b) is precomputed,
# so only the h @ W_hh matmul remains on the serial critical path.
# ----------------------------------------------------------------------------
def lstm_recurrence_kernel(xw_ref, whh_ref, h_out_ref, h_sc, c_sc):
    """
    xw_ref:    (Tt, Bb, 4H)  f32   precomputed x_t @ W_ih + (b_ih + b_hh), time-major
    whh_ref:   (H, 4H)       bf16  recurrent weight, PyTorch gate order i,f,g,o
    h_out_ref: (Tt, Bb, H)   bf16  hidden state per timestep (FC applied outside)
    h_sc/c_sc: (Bb, H)       f32   recurrent state; persists across time blocks
    """
    @pl.when(pl.program_id(1) == 0)          # first time block of this batch block
    def _():
        h_sc[...] = jnp.zeros_like(h_sc)     # init_hidden: zeros
        c_sc[...] = jnp.zeros_like(c_sc)

    w_hh = whh_ref[...]                      # hoisted: loaded once per grid step
    H = h_sc.shape[-1]
    Tt = xw_ref.shape[0]

    def step(tt, carry):
        h_prev, c_prev = carry                                        # f32 (Bb, H)
        gates = xw_ref[tt] + jnp.dot(h_prev.astype(jnp.bfloat16), w_hh,
                                     preferred_element_type=jnp.float32)  # (Bb, 4H)
        i_g = jax.nn.sigmoid(gates[:, 0 * H:1 * H])
        f_g = jax.nn.sigmoid(gates[:, 1 * H:2 * H])
        g_g = jnp.tanh(gates[:, 2 * H:3 * H])
        o_g = jax.nn.sigmoid(gates[:, 3 * H:4 * H])

        c_new = f_g * c_prev + i_g * g_g
        h_new = o_g * jnp.tanh(c_new)
        h_out_ref[tt] = h_new.astype(h_out_ref.dtype)
        return h_new, c_new

    h_fin, c_fin = lax.fori_loop(0, Tt, step, (h_sc[...], c_sc[...]), unroll=True)
    h_sc[...] = h_fin
    c_sc[...] = c_fin


# ----------------------------------------------------------------------------
# Wrapper: equivalent of LSTMModel.forward(x) with state=None, return_state=False
# ----------------------------------------------------------------------------
def lstm_model_forward(tokens, params, *, time_block=16):
    emb_table = params["embedding"]              # (V, E)
    w_ih, w_hh = params["w_ih"], params["w_hh"]  # (E, 4H), (H, 4H)
    b = params["b"]                              # (1, 4H) = b_ih + b_hh
    w_fc, b_fc = params["w_fc"], params["b_fc"]  # (H, V), (1, V)

    B, T = tokens.shape
    E = emb_table.shape[1]
    H = w_hh.shape[0]
    V = w_fc.shape[1]

    # ---- glue: embedding gather + layout / padding prep (plain JAX) ----
    # TODO(synk): dynamic embedding gather has no clean rectangular BlockSpec; done in XLA.
    x_emb = jnp.take(emb_table, tokens, axis=0)                  # (B, T, E)
    x_tbe = jnp.transpose(x_emb, (1, 0, 2))                      # (T, B, E) time-major

    Bp = max(_round_up(B, 16), 16)               # full bf16 (16,128) sublane group
    Tt = min(time_block, T)                      # timesteps per grid step
    Tp = _round_up(T, Tt)
    x_tbe = jnp.pad(x_tbe, ((0, Tp - T), (0, Bp - B), (0, 0))).astype(jnp.bfloat16)

    # ---- Kernel 0: hoisted input projection xW = x @ W_ih + b (parallel MXU) ----
    xw = dense(x_tbe.reshape(Tp * Bp, E), w_ih.astype(jnp.bfloat16), b, jnp.float32)
    xw = xw.reshape(Tp, Bp, 4 * H)

    # ---- Kernel 1: the recurrence (time axis sequential, batch blocks parallel) ----
    Bb = min(Bp, 16)                             # batch block (v7x: split across cores)
    h_all = pl.pallas_call(
        lstm_recurrence_kernel,
        out_shape=jax.ShapeDtypeStruct((Tp, Bp, H), jnp.bfloat16),
        grid_spec=pltpu.PrefetchScalarGridSpec(
            num_scalar_prefetch=0,
            grid=(Bp // Bb, Tp // Tt),
            in_specs=[
                pl.BlockSpec((Tt, Bb, 4 * H), lambda bb, tb: (tb, bb, 0)),
                _spec((H, 4 * H), lambda bb, tb: (0, 0), buffered=1),  # invariant W_hh
            ],
            out_specs=pl.BlockSpec((Tt, Bb, H), lambda bb, tb: (tb, bb, 0)),
            scratch_shapes=[
                pltpu.VMEM((Bb, H), jnp.float32),    # h state
                pltpu.VMEM((Bb, H), jnp.float32),    # c state
            ],
        ),
        compiler_params=pltpu.CompilerParams(
            dimension_semantics=("parallel", "arbitrary"),
        ),
    )(xw, w_hh.astype(jnp.bfloat16))

    # ---- Kernel 2: output projection, only on valid (T, B) rows ----
    h_valid = h_all[:T, :B].reshape(T * B, H)                     # drop time/batch padding
    M = T * B
    Mp = _round_up(M, 8)
    h_valid = jnp.pad(h_valid, ((0, Mp - M), (0, 0)))
    Vp = _round_up(V, 128)                                        # lane-dense vocab axis
    w_fc_p = jnp.pad(w_fc, ((0, 0), (0, Vp - V))).astype(jnp.bfloat16)
    b_fc_p = jnp.pad(b_fc, ((0, 0), (0, Vp - V)))

    logits = dense(h_valid, w_fc_p, b_fc_p, jnp.float32)          # (Mp, Vp) f32

    # un-pad and return batch-first logits (B, T, V), matching nn.LSTM(batch_first=True)
    logits = logits[:M, :V].reshape(T, B, V)
    return jnp.transpose(logits, (1, 0, 2))


# ----------------------------------------------------------------------------
# Pure-JAX f32 reference (torch.nn.LSTM semantics, gate order i,f,g,o)
# ----------------------------------------------------------------------------
def reference_forward(tokens, params):
    emb = jnp.take(params["embedding"], tokens, axis=0)   # (B, T, E)
    B, T, _ = emb.shape
    H = params["w_hh"].shape[0]

    def step(carry, x_t):
        h, c = carry
        gates = x_t @ params["w_ih"] + h @ params["w_hh"] + params["b"][0]
        i = jax.nn.sigmoid(gates[:, 0 * H:1 * H])
        f = jax.nn.sigmoid(gates[:, 1 * H:2 * H])
        g = jnp.tanh(gates[:, 2 * H:3 * H])
        o = jax.nn.sigmoid(gates[:, 3 * H:4 * H])
        c = f * c + i * g
        h = o * jnp.tanh(c)
        return (h, c), h

    h0 = jnp.zeros((B, H), jnp.float32)
    c0 = jnp.zeros((B, H), jnp.float32)
    (_, _), hs = jax.lax.scan(step, (h0, c0), jnp.transpose(emb, (1, 0, 2)))
    out = hs @ params["w_fc"] + params["b_fc"][0]          # (T, B, V)
    return jnp.transpose(out, (1, 0, 2))


def init_params(key, vocab_size, embedding_dim, hidden_size):
    """Deterministic synthetic init (shapes match nn.Embedding / nn.LSTM / nn.Linear)."""
    k = jax.random.split(key, 7)
    bound = 1.0 / np.sqrt(hidden_size)
    u = lambda kk, shape, bnd: jax.random.uniform(kk, shape, jnp.float32, -bnd, bnd)
    return {
        "embedding": jax.random.normal(k[0], (vocab_size, embedding_dim), jnp.float32),
        "w_ih": u(k[1], (embedding_dim, 4 * hidden_size), bound),
        "w_hh": u(k[2], (hidden_size, 4 * hidden_size), bound),
        "b": u(k[3], (1, 4 * hidden_size), bound) + u(k[4], (1, 4 * hidden_size), bound),
        "w_fc": u(k[5], (hidden_size, vocab_size), bound),
        "b_fc": u(k[6], (1, vocab_size), bound),
    }


if __name__ == "__main__":
    # Small shapes consistent with the module (vocab, embed, hidden scaled down).
    B, T = 2, 8
    vocab_size, embedding_dim, hidden_size = 64, 128, 128

    key = jax.random.PRNGKey(0)
    pkey, tkey = jax.random.split(key)
    params = init_params(pkey, vocab_size, embedding_dim, hidden_size)
    tokens = jax.random.randint(tkey, (B, T), 0, vocab_size, dtype=jnp.int32)

    out = jax.block_until_ready(jax.jit(lstm_model_forward)(tokens, params))
    assert out.shape == (B, T, vocab_size), out.shape

    ref = jax.block_until_ready(reference_forward(tokens, params))
    # bf16 weights/activations with f32 gates/state/accumulation: widened tol vs f32 ref.
    np.testing.assert_allclose(np.asarray(out), np.asarray(ref), rtol=5e-2, atol=5e-2)

    print("KERNEL_OK")
</pallas_src>

<mosaic_0001>
module attributes {stable_mosaic.version = 11 : i64} {
  func.func @fc_kernel(%arg0: i32, %arg1: memref<128x128xbf16, #tpu.memory_space<vmem>>, %arg2: memref<128x512xbf16, #tpu.memory_space<vmem>>, %arg3: memref<1x512xf32, #tpu.memory_space<vmem>>, %arg4: memref<128x512xf32, #tpu.memory_space<vmem>>) attributes {dimension_semantics = [#tpu.dimension_semantics<parallel>], iteration_bounds = array<i64: 1>, scalar_prefetch = 0 : i64, scratch_operands = 0 : i64, tpu.core_type = #tpu.core_type<tc>, window_params = [{pipeline_mode = #tpu.pipeline_mode<synchronous>, transform_indices = @transform_0, window_bounds = array<i64: 128, 128>}, {transform_indices = @transform_1, window_bounds = array<i64: 128, 512>}, {transform_indices = @transform_2, window_bounds = array<i64: 1, 512>}, {transform_indices = @transform_3, window_bounds = array<i64: 128, 512>}]} {
    %c0 = arith.constant 0 : index
    %c0_0 = arith.constant 0 : index
    %0 = vector.load %arg1[%c0, %c0_0] : memref<128x128xbf16, #tpu.memory_space<vmem>>, vector<128x128xbf16>
    %c0_1 = arith.constant 0 : index
    %c0_2 = arith.constant 0 : index
    %1 = vector.load %arg2[%c0_1, %c0_2] : memref<128x512xbf16, #tpu.memory_space<vmem>>, vector<128x512xbf16>
    %cst = arith.constant dense<0.000000e+00> : vector<128x512xf32>
    %2 = tpu.matmul %0, %1, %cst {dimension_numbers = #tpu.dot_dimension_numbers<[1], [0], [0], [1], [0, 0, 1, 1], [], []>} : vector<128x128xbf16>, vector<128x512xbf16>, vector<128x512xf32> -> vector<128x512xf32>
    %c0_3 = arith.constant 0 : index
    %c0_4 = arith.constant 0 : index
    %3 = vector.load %arg3[%c0_3, %c0_4] : memref<1x512xf32, #tpu.memory_space<vmem>>, vector<1x512xf32>
    %4 = vector.broadcast %3 : vector<1x512xf32> to vector<128x512xf32>
    %5 = arith.addf %2, %4 : vector<128x512xf32>
    %c0_5 = arith.constant 0 : index
    %c0_6 = arith.constant 0 : index
    %6 = vector.load %arg4[%c0_5, %c0_6] : memref<128x512xf32, #tpu.memory_space<vmem>>, vector<128x512xf32>
    tpu.vector_store %arg4[%c0_5, %c0_6], %5 {strides = array<i32>} : memref<128x512xf32, #tpu.memory_space<vmem>>, vector<128x512xf32>,
    return
  }
  func.func @transform_0(%arg0: i32) -> (i32, i32) {
    %c0_i32 = arith.constant 0 : i32
    %c0_i32_0 = arith.constant 0 : i32
    %c0_i32_1 = arith.constant 0 : i32
    return %c0_i32, %c0_i32_0 : i32, i32
  }
  func.func @transform_1(%arg0: i32) -> (i32, i32) {
    %c0_i32 = arith.constant 0 : i32
    %c0_i32_0 = arith.constant 0 : i32
    return %c0_i32, %arg0 : i32, i32
  }
  func.func @transform_2(%arg0: i32) -> (i32, i32) {
    %c0_i32 = arith.constant 0 : i32
    %c0_i32_0 = arith.constant 0 : i32
    return %c0_i32, %arg0 : i32, i32
  }
  func.func @transform_3(%arg0: i32) -> (i32, i32) {
    %c0_i32 = arith.constant 0 : i32
    %c0_i32_0 = arith.constant 0 : i32
    return %c0_i32, %arg0 : i32, i32
  }
}

module attributes {stable_mosaic.version = 11 : i64} {
  func.func @lstm_recurrence_kernel(%arg0: i32, %arg1: i32, %arg2: memref<8x16x512xf32, #tpu.memory_space<vmem>>, %arg3: memref<128x512xbf16, #tpu.memory_space<vmem>>, %arg4: memref<8x16x128xbf16, #tpu.memory_space<vmem>>, %arg5: memref<16x128xf32, #tpu.memory_space<vmem>>, %arg6: memref<16x128xf32, #tpu.memory_space<vmem>>) attributes {dimension_semantics = [#tpu.dimension_semantics<parallel>, #tpu.dimension_semantics<arbitrary>], iteration_bounds = array<i64: 1, 1>, scalar_prefetch = 0 : i64, scratch_operands = 2 : i64, tpu.core_type = #tpu.core_type<tc>, window_params = [{transform_indices = @transform_0, window_bounds = array<i64: 8, 16, 512>}, {pipeline_mode = #tpu.pipeline_mode<synchronous>, transform_indices = @transform_1, window_bounds = array<i64: 128, 512>}, {transform_indices = @transform_2, window_bounds = array<i64: 8, 16, 128>}]} {
    %c0_i32 = arith.constant 0 : i32
    %0 = arith.cmpi eq, %arg1, %c0_i32 : i32
    %1 = arith.extui %0 : i1 to i32
    %c0_i32_0 = arith.constant 0 : i32
    %2 = arith.cmpi ne, %1, %c0_i32_0 : i32
    scf.if %2 {
      %cst_74 = arith.constant 0.000000e+00 : f32
      %296 = vector.broadcast %cst_74 : f32 to vector<16x128xf32>
      %c0_75 = arith.constant 0 : index
      %c0_76 = arith.constant 0 : index
      %297 = vector.load %arg5[%c0_75, %c0_76] : memref<16x128xf32, #tpu.memory_space<vmem>>, vector<16x128xf32>
      tpu.vector_store %arg5[%c0_75, %c0_76], %296 {strides = array<i32>} : memref<16x128xf32, #tpu.memory_space<vmem>>, vector<16x128xf32>,
      %cst_77 = arith.constant 0.000000e+00 : f32
      %298 = vector.broadcast %cst_77 : f32 to vector<16x128xf32>
      %c0_78 = arith.constant 0 : index
      %c0_79 = arith.constant 0 : index
      %299 = vector.load %arg6[%c0_78, %c0_79] : memref<16x128xf32, #tpu.memory_space<vmem>>, vector<16x128xf32>
      tpu.vector_store %arg6[%c0_78, %c0_79], %298 {strides = array<i32>} : memref<16x128xf32, #tpu.memory_space<vmem>>, vector<16x128xf32>,
    } else {
    }
    %c0 = arith.constant 0 : index
    %c0_1 = arith.constant 0 : index
    %3 = vector.load %arg3[%c0, %c0_1] : memref<128x512xbf16, #tpu.memory_space<vmem>>, vector<128x512xbf16>
    %c0_2 = arith.constant 0 : index
    %c0_3 = arith.constant 0 : index
    %4 = vector.load %arg5[%c0_2, %c0_3] : memref<16x128xf32, #tpu.memory_space<vmem>>, vector<16x128xf32>
    %c0_4 = arith.constant 0 : index
    %c0_5 = arith.constant 0 : index
    %5 = vector.load %arg6[%c0_4, %c0_5] : memref<16x128xf32, #tpu.memory_space<vmem>>, vector<16x128xf32>
    %c0_i32_6 = arith.constant 0 : i32
    %6 = arith.index_cast %c0_i32_6 : i32 to index
    %c0_7 = arith.constant 0 : index
    %c0_8 = arith.constant 0 : index
    %7 = vector.load %arg2[%6, %c0_7, %c0_8] : memref<8x16x512xf32, #tpu.memory_space<vmem>>, vector<1x16x512xf32>
    %8 = vector.shape_cast %7 : vector<1x16x512xf32> to vector<16x512xf32>
    %9 = arith.truncf %4 : vector<16x128xf32> to vector<16x128xbf16>
    %cst = arith.constant dense<0.000000e+00> : vector<16x512xf32>
    %10 = tpu.matmul %9, %3, %cst {dimension_numbers = #tpu.dot_dimension_numbers<[1], [0], [0], [1], [0, 0, 1, 1], [], []>} : vector<16x128xbf16>, vector<128x512xbf16>, vector<16x512xf32> -> vector<16x512xf32>
    %11 = arith.addf %8, %10 : vector<16x512xf32>
    %12 = vector.extract_strided_slice %11 {offsets = [0, 0], sizes = [16, 128], strides = [1, 1]} : vector<16x512xf32> to vector<16x128xf32>
    %13 = arith.negf %12 : vector<16x128xf32>
    %14 = math.exp %13 : vector<16x128xf32>
    %cst_9 = arith.constant 1.000000e+00 : f32
    %15 = vector.broadcast %cst_9 : f32 to vector<16x128xf32>
    %16 = arith.addf %15, %14 : vector<16x128xf32>
    %17 = arith.divf %15, %16 : vector<16x128xf32>
    %18 = vector.extract_strided_slice %11 {offsets = [0, 128], sizes = [16, 128], strides = [1, 1]} : vector<16x512xf32> to vector<16x128xf32>
    %19 = arith.negf %18 : vector<16x128xf32>
    %20 = math.exp %19 : vector<16x128xf32>
    %cst_10 = arith.constant 1.000000e+00 : f32
    %21 = vector.broadcast %cst_10 : f32 to vector<16x128xf32>
    %22 = arith.addf %21, %20 : vector<16x128xf32>
    %23 = arith.divf %21, %22 : vector<16x128xf32>
    %24 = vector.extract_strided_slice %11 {offsets = [0, 256], sizes = [16, 128], strides = [1, 1]} : vector<16x512xf32> to vector<16x128xf32>
    %25 = math.tanh %24 : vector<16x128xf32>
    %26 = vector.extract_strided_slice %11 {offsets = [0, 384], sizes = [16, 128], strides = [1, 1]} : vector<16x512xf32> to vector<16x128xf32>
    %27 = arith.negf %26 : vector<16x128xf32>
    %28 = math.exp %27 : vector<16x128xf32>
    %cst_11 = arith.constant 1.000000e+00 : f32
    %29 = vector.broadcast %cst_11 : f32 to vector<16x128xf32>
    %30 = arith.addf %29, %28 : vector<16x128xf32>
    %31 = arith.divf %29, %30 : vector<16x128xf32>
    %32 = arith.mulf %23, %5 : vector<16x128xf32>
    %33 = arith.mulf %17, %25 : vector<16x128xf32>
    %34 = arith.addf %32, %33 : vector<16x128xf32>
    %35 = math.tanh %34 : vector<16x128xf32>
    %36 = arith.mulf %31, %35 : vector<16x128xf32>
    %37 = arith.truncf %36 : vector<16x128xf32> to vector<16x128xbf16>
    %38 = arith.index_cast %c0_i32_6 : i32 to index
    %c0_12 = arith.constant 0 : index
    %c0_13 = arith.constant 0 : index
    %39 = vector.load %arg4[%38, %c0_12, %c0_13] : memref<8x16x128xbf16, #tpu.memory_space<vmem>>, vector<1x16x128xbf16>
    %40 = vector.shape_cast %39 : vector<1x16x128xbf16> to vector<16x128xbf16>
    %41 = vector.shape_cast %37 : vector<16x128xbf16> to vector<1x16x128xbf16>
    tpu.vector_store %arg4[%38, %c0_12, %c0_13], %41 {strides = array<i32>} : memref<8x16x128xbf16, #tpu.memory_space<vmem>>, vector<1x16x128xbf16>,
    %c1_i32 = arith.constant 1 : i32
    %42 = arith.index_cast %c1_i32 : i32 to index
    %c0_14 = arith.constant 0 : index
    %c0_15 = arith.constant 0 : index
    %43 = vector.load %arg2[%42, %c0_14, %c0_15] : memref<8x16x512xf32, #tpu.memory_space<vmem>>, vector<1x16x512xf32>
    %44 = vector.shape_cast %43 : vector<1x16x512xf32> to vector<16x512xf32>
    %45 = arith.truncf %36 : vector<16x128xf32> to vector<16x128xbf16>
    %cst_16 = arith.constant dense<0.000000e+00> : vector<16x512xf32>
    %46 = tpu.matmul %45, %3, %cst_16 {dimension_numbers = #tpu.dot_dimension_numbers<[1], [0], [0], [1], [0, 0, 1, 1], [], []>} : vector<16x128xbf16>, vector<128x512xbf16>, vector<16x512xf32> -> vector<16x512xf32>
    %47 = arith.addf %44, %46 : vector<16x512xf32>
    %48 = vector.extract_strided_slice %47 {offsets = [0, 0], sizes = [16, 128], strides = [1, 1]} : vector<16x512xf32> to vector<16x128xf32>
    %49 = arith.negf %48 : vector<16x128xf32>
    %50 = math.exp %49 : vector<16x128xf32>
    %cst_17 = arith.constant 1.000000e+00 : f32
    %51 = vector.broadcast %cst_17 : f32 to vector<16x128xf32>
    %52 = arith.addf %51, %50 : vector<16x128xf32>
    %53 = arith.divf %51, %52 : vector<16x128xf32>
    %54 = vector.extract_strided_slice %47 {offsets = [0, 128], sizes = [16, 128], strides = [1, 1]} : vector<16x512xf32> to vector<16x128xf32>
    %55 = arith.negf %54 : vector<16x128xf32>
    %56 = math.exp %55 : vector<16x128xf32>
    %cst_18 = arith.constant 1.000000e+00 : f32
    %57 = vector.broadcast %cst_18 : f32 to vector<16x128xf32>
    %58 = arith.addf %57, %56 : vector<16x128xf32>
    %59 = arith.divf %57, %58 : vector<16x128xf32>
    %60 = vector.extract_strided_slice %47 {offsets = [0, 256], sizes = [16, 128], strides = [1, 1]} : vector<16x512xf32> to vector<16x128xf32>
    %61 = math.tanh %60 : vector<16x128xf32>
    %62 = vector.extract_strided_slice %47 {offsets = [0, 384], sizes = [16, 128], strides = [1, 1]} : vector<16x512xf32> to vector<16x128xf32>
    %63 = arith.negf %62 : vector<16x128xf32>
    %64 = math.exp %63 : vector<16x128xf32>
    %cst_19 = arith.constant 1.000000e+00 : f32
    %65 = vector.broadcast %cst_19 : f32 to vector<16x128xf32>
    %66 = arith.addf %65, %64 : vector<16x128xf32>
    %67 = arith.divf %65, %66 : vector<16x128xf32>
    %68 = arith.mulf %59, %34 : vector<16x128xf32>
    %69 = arith.mulf %53, %61 : vector<16x128xf32>
    %70 = arith.addf %68, %69 : vector<16x128xf32>
    %71 = math.tanh %70 : vector<16x128xf32>
    %72 = arith.mulf %67, %71 : vector<16x128xf32>
    %73 = arith.truncf %72 : vector<16x128xf32> to vector<16x128xbf16>
    %74 = arith.index_cast %c1_i32 : i32 to index
    %c0_20 = arith.constant 0 : index
    %c0_21 = arith.constant 0 : index
    %75 = vector.load %arg4[%74, %c0_20, %c0_21] : memref<8x16x128xbf16, #tpu.memory_space<vmem>>, vector<1x16x128xbf16>
    %76 = vector.shape_cast %75 : vector<1x16x128xbf16> to vector<16x128xbf16>
    %77 = vector.shape_cast %73 : vector<16x128xbf16> to vector<1x16x128xbf16>
    tpu.vector_store %arg4[%74, %c0_20, %c0_21], %77 {strides = array<i32>} : memref<8x16x128xbf16, #tpu.memory_space<vmem>>, vector<1x16x128xbf16>,
    %c2_i32 = arith.constant 2 : i32
    %78 = arith.index_cast %c2_i32 : i32 to index
    %c0_22 = arith.constant 0 : index
    %c0_23 = arith.constant 0 : index
    %79 = vector.load %arg2[%78, %c0_22, %c0_23] : memref<8x16x512xf32, #tpu.memory_space<vmem>>, vector<1x16x512xf32>
    %80 = vector.shape_cast %79 : vector<1x16x512xf32> to vector<16x512xf32>
    %81 = arith.truncf %72 : vector<16x128xf32> to vector<16x128xbf16>
    %cst_24 = arith.constant dense<0.000000e+00> : vector<16x512xf32>
    %82 = tpu.matmul %81, %3, %cst_24 {dimension_numbers = #tpu.dot_dimension_numbers<[1], [0], [0], [1], [0, 0, 1, 1], [], []>} : vector<16x128xbf16>, vector<128x512xbf16>, vector<16x512xf32> -> vector<16x512xf32>
    %83 = arith.addf %80, %82 : vector<16x512xf32>
    %84 = vector.extract_strided_slice %83 {offsets = [0, 0], sizes = [16, 128], strides = [1, 1]} : vector<16x512xf32> to vector<16x128xf32>
    %85 = arith.negf %84 : vector<16x128xf32>
    %86 = math.exp %85 : vector<16x128xf32>
    %cst_25 = arith.constant 1.000000e+00 : f32
    %87 = vector.broadcast %cst_25 : f32 to vector<16x128xf32>
    %88 = arith.addf %87, %86 : vector<16x128xf32>
    %89 = arith.divf %87, %88 : vector<16x128xf32>
    %90 = vector.extract_strided_slice %83 {offsets = [0, 128], sizes = [16, 128], strides = [1, 1]} : vector<16x512xf32> to vector<16x128xf32>
    %91 = arith.negf %90 : vector<16x128xf32>
    %92 = math.exp %91 : vector<16x128xf32>
    %cst_26 = arith.constant 1.000000e+00 : f32
    %93 = vector.broadcast %cst_26 : f32 to vector<16x128xf32>
    %94 = arith.addf %93, %92 : vector<16x128xf32>
    %95 = arith.divf %93, %94 : vector<16x128xf32>
    %96 = vector.extract_strided_slice %83 {offsets = [0, 256], sizes = [16, 128], strides = [1, 1]} : vector<16x512xf32> to vector<16x128xf32>
    %97 = math.tanh %96 : vector<16x128xf32>
    %98 = vector.extract_strided_slice %83 {offsets = [0, 384], sizes = [16, 128], strides = [1, 1]} : vector<16x512xf32> to vector<16x128xf32>
    %99 = arith.negf %98 : vector<16x128xf32>
    %100 = math.exp %99 : vector<16x128xf32>
    %cst_27 = arith.constant 1.000000e+00 : f32
    %101 = vector.broadcast %cst_27 : f32 to vector<16x128xf32>
    %102 = arith.addf %101, %100 : vector<16x128xf32>
    %103 = arith.divf %101, %102 : vector<16x128xf32>
    %104 = arith.mulf %95, %70 : vector<16x128xf32>
    %105 = arith.mulf %89, %97 : vector<16x128xf32>
    %106 = arith.addf %104, %105 : vector<16x128xf32>
    %107 = math.tanh %106 : vector<16x128xf32>
    %108 = arith.mulf %103, %107 : vector<16x128xf32>
    %109 = arith.truncf %108 : vector<16x128xf32> to vector<16x128xbf16>
    %110 = arith.index_cast %c2_i32 : i32 to index
    %c0_28 = arith.constant 0 : index
    %c0_29 = arith.constant 0 : index
    %111 = vector.load %arg4[%110, %c0_28, %c0_29] : memref<8x16x128xbf16, #tpu.memory_space<vmem>>, vector<1x16x128xbf16>
    %112 = vector.shape_cast %111 : vector<1x16x128xbf16> to vector<16x128xbf16>
    %113 = vector.shape_cast %109 : vector<16x128xbf16> to vector<1x16x128xbf16>
    tpu.vector_store %arg4[%110, %c0_28, %c0_29], %113 {strides = array<i32>} : memref<8x16x128xbf16, #tpu.memory_space<vmem>>, vector<1x16x128xbf16>,
    %c3_i32 = arith.constant 3 : i32
    %114 = arith.index_cast %c3_i32 : i32 to index
    %c0_30 = arith.constant 0 : index
    %c0_31 = arith.constant 0 : index
    %115 = vector.load %arg2[%114, %c0_30, %c0_31] : memref<8x16x512xf32, #tpu.memory_space<vmem>>, vector<1x16x512xf32>
    %116 = vector.shape_cast %115 : vector<1x16x512xf32> to vector<16x512xf32>
    %117 = arith.truncf %108 : vector<16x128xf32> to vector<16x128xbf16>
    %cst_32 = arith.constant dense<0.000000e+00> : vector<16x512xf32>
    %118 = tpu.matmul %117, %3, %cst_32 {dimension_numbers = #tpu.dot_dimension_numbers<[1], [0], [0], [1], [0, 0, 1, 1], [], []>} : vector<16x128xbf16>, vector<128x512xbf16>, vector<16x512xf32> -> vector<16x512xf32>
    %119 = arith.addf %116, %118 : vector<16x512xf32>
    %120 = vector.extract_strided_slice %119 {offsets = [0, 0], sizes = [16, 128], strides = [1, 1]} : vector<16x512xf32> to vector<16x128xf32>
    %121 = arith.negf %120 : vector<16x128xf32>
    %122 = math.exp %121 : vector<16x128xf32>
    %cst_33 = arith.constant 1.000000e+00 : f32
    %123 = vector.broadcast %cst_33 : f32 to vector<16x128xf32>
    %124 = arith.addf %123, %122 : vector<16x128xf32>
    %125 = arith.divf %123, %124 : vector<16x128xf32>
    %126 = vector.extract_strided_slice %119 {offsets = [0, 128], sizes = [16, 128], strides = [1, 1]} : vector<16x512xf32> to vector<16x128xf32>
    %127 = arith.negf %126 : vector<16x128xf32>
    %128 = math.exp %127 : vector<16x128xf32>
    %cst_34 = arith.constant 1.000000e+00 : f32
    %129 = vector.broadcast %cst_34 : f32 to vector<16x128xf32>
    %130 = arith.addf %129, %128 : vector<16x128xf32>
    %131 = arith.divf %129, %130 : vector<16x128xf32>
    %132 = vector.extract_strided_slice %119 {offsets = [0, 256], sizes = [16, 128], strides = [1, 1]} : vector<16x512xf32> to vector<16x128xf32>
    %133 = math.tanh %132 : vector<16x128xf32>
    %134 = vector.extract_strided_slice %119 {offsets = [0, 384], sizes = [16, 128], strides = [1, 1]} : vector<16x512xf32> to vector<16x128xf32>
    %135 = arith.negf %134 : vector<16x128xf32>
    %136 = math.exp %135 : vector<16x128xf32>
    %cst_35 = arith.constant 1.000000e+00 : f32
    %137 = vector.broadcast %cst_35 : f32 to vector<16x128xf32>
    %138 = arith.addf %137, %136 : vector<16x128xf32>
    %139 = arith.divf %137, %138 : vector<16x128xf32>
    %140 = arith.mulf %131, %106 : vector<16x128xf32>
    %141 = arith.mulf %125, %133 : vector<16x128xf32>
    %142 = arith.addf %140, %141 : vector<16x128xf32>
    %143 = math.tanh %142 : vector<16x128xf32>
    %144 = arith.mulf %139, %143 : vector<16x128xf32>
    %145 = arith.truncf %144 : vector<16x128xf32> to vector<16x128xbf16>
    %146 = arith.index_cast %c3_i32 : i32 to index
    %c0_36 = arith.constant 0 : index
    %c0_37 = arith.constant 0 : index
    %147 = vector.load %arg4[%146, %c0_36, %c0_37] : memref<8x16x128xbf16, #tpu.memory_space<vmem>>, vector<1x16x128xbf16>
    %148 = vector.shape_cast %147 : vector<1x16x128xbf16> to vector<16x128xbf16>
    %149 = vector.shape_cast %145 : vector<16x128xbf16> to vector<1x16x128xbf16>
    tpu.vector_store %arg4[%146, %c0_36, %c0_37], %149 {strides = array<i32>} : memref<8x16x128xbf16, #tpu.memory_space<vmem>>, vector<1x16x128xbf16>,
    %c4_i32 = arith.constant 4 : i32
    %150 = arith.index_cast %c4_i32 : i32 to index
    %c0_38 = arith.constant 0 : index
    %c0_39 = arith.constant 0 : index
    %151 = vector.load %arg2[%150, %c0_38, %c0_39] : memref<8x16x512xf32, #tpu.memory_space<vmem>>, vector<1x16x512xf32>
    %152 = vector.shape_cast %151 : vector<1x16x512xf32> to vector<16x512xf32>
    %153 = arith.truncf %144 : vector<16x128xf32> to vector<16x128xbf16>
    %cst_40 = arith.constant dense<0.000000e+00> : vector<16x512xf32>
    %154 = tpu.matmul %153, %3, %cst_40 {dimension_numbers = #tpu.dot_dimension_numbers<[1], [0], [0], [1], [0, 0, 1, 1], [], []>} : vector<16x128xbf16>, vector<128x512xbf16>, vector<16x512xf32> -> vector<16x512xf32>
    %155 = arith.addf %152, %154 : vector<16x512xf32>
    %156 = vector.extract_strided_slice %155 {offsets = [0, 0], sizes = [16, 128], strides = [1, 1]} : vector<16x512xf32> to vector<16x128xf32>
    %157 = arith.negf %156 : vector<16x128xf32>
    %158 = math.exp %157 : vector<16x128xf32>
    %cst_41 = arith.constant 1.000000e+00 : f32
    %159 = vector.broadcast %cst_41 : f32 to vector<16x128xf32>
    %160 = arith.addf %159, %158 : vector<16x128xf32>
    %161 = arith.divf %159, %160 : vector<16x128xf32>
    %162 = vector.extract_strided_slice %155 {offsets = [0, 128], sizes = [16, 128], strides = [1, 1]} : vector<16x512xf32> to vector<16x128xf32>
    %163 = arith.negf %162 : vector<16x128xf32>
    %164 = math.exp %163 : vector<16x128xf32>
    %cst_42 = arith.constant 1.000000e+00 : f32
    %165 = vector.broadcast %cst_42 : f32 to vector<16x128xf32>
    %166 = arith.addf %165, %164 : vector<16x128xf32>
    %167 = arith.divf %165, %166 : vector<16x128xf32>
    %168 = vector.extract_strided_slice %155 {offsets = [0, 256], sizes = [16, 128], strides = [1, 1]} : vector<16x512xf32> to vector<16x128xf32>
    %169 = math.tanh %168 : vector<16x128xf32>
    %170 = vector.extract_strided_slice %155 {offsets = [0, 384], sizes = [16, 128], strides = [1, 1]} : vector<16x512xf32> to vector<16x128xf32>
    %171 = arith.negf %170 : vector<16x128xf32>
    %172 = math.exp %171 : vector<16x128xf32>
    %cst_43 = arith.constant 1.000000e+00 : f32
    %173 = vector.broadcast %cst_43 : f32 to vector<16x128xf32>
    %174 = arith.addf %173, %172 : vector<16x128xf32>
    %175 = arith.divf %173, %174 : vector<16x128xf32>
    %176 = arith.mulf %167, %142 : vector<16x128xf32>
    %177 = arith.mulf %161, %169 : vector<16x128xf32>
    %178 = arith.addf %176, %177 : vector<16x128xf32>
    %179 = math.tanh %178 : vector<16x128xf32>
    %180 = arith.mulf %175, %179 : vector<16x128xf32>
    %181 = arith.truncf %180 : vector<16x128xf32> to vector<16x128xbf16>
    %182 = arith.index_cast %c4_i32 : i32 to index
    %c0_44 = arith.constant 0 : index
    %c0_45 = arith.constant 0 : index
    %183 = vector.load %arg4[%182, %c0_44, %c0_45] : memref<8x16x128xbf16, #tpu.memory_space<vmem>>, vector<1x16x128xbf16>
    %184 = vector.shape_cast %183 : vector<1x16x128xbf16> to vector<16x128xbf16>
    %185 = vector.shape_cast %181 : vector<16x128xbf16> to vector<1x16x128xbf16>
    tpu.vector_store %arg4[%182, %c0_44, %c0_45], %185 {strides = array<i32>} : memref<8x16x128xbf16, #tpu.memory_space<vmem>>, vector<1x16x128xbf16>,
    %c5_i32 = arith.constant 5 : i32
    %186 = arith.index_cast %c5_i32 : i32 to index
    %c0_46 = arith.constant 0 : index
    %c0_47 = arith.constant 0 : index
    %187 = vector.load %arg2[%186, %c0_46, %c0_47] : memref<8x16x512xf32, #tpu.memory_space<vmem>>, vector<1x16x512xf32>
    %188 = vector.shape_cast %187 : vector<1x16x512xf32> to vector<16x512xf32>
    %189 = arith.truncf %180 : vector<16x128xf32> to vector<16x128xbf16>
    %cst_48 = arith.constant dense<0.000000e+00> : vector<16x512xf32>
    %190 = tpu.matmul %189, %3, %cst_48 {dimension_numbers = #tpu.dot_dimension_numbers<[1], [0], [0], [1], [0, 0, 1, 1], [], []>} : vector<16x128xbf16>, vector<128x512xbf16>, vector<16x512xf32> -> vector<16x512xf32>
    %191 = arith.addf %188, %190 : vector<16x512xf32>
    %192 = vector.extract_strided_slice %191 {offsets = [0, 0], sizes = [16, 128], strides = [1, 1]} : vector<16x512xf32> to vector<16x128xf32>
    %193 = arith.negf %192 : vector<16x128xf32>
    %194 = math.exp %193 : vector<16x128xf32>
    %cst_49 = arith.constant 1.000000e+00 : f32
    %195 = vector.broadcast %cst_49 : f32 to vector<16x128xf32>
    %196 = arith.addf %195, %194 : vector<16x128xf32>
    %197 = arith.divf %195, %196 : vector<16x128xf32>
    %198 = vector.extract_strided_slice %191 {offsets = [0, 128], sizes = [16, 128], strides = [1, 1]} : vector<16x512xf32> to vector<16x128xf32>
    %199 = arith.negf %198 : vector<16x128xf32>
    %200 = math.exp %199 : vector<16x128xf32>
    %cst_50 = arith.constant 1.000000e+00 : f32
    %201 = vector.broadcast %cst_50 : f32 to vector<16x128xf32>
    %202 = arith.addf %201, %200 : vector<16x128xf32>
    %203 = arith.divf %201, %202 : vector<16x128xf32>
    %204 = vector.extract_strided_slice %191 {offsets = [0, 256], sizes = [16, 128], strides = [1, 1]} : vector<16x512xf32> to vector<16x128xf32>
    %205 = math.tanh %204 : vector<16x128xf32>
    %206 = vector.extract_strided_slice %191 {offsets = [0, 384], sizes = [16, 128], strides = [1, 1]} : vector<16x512xf32> to vector<16x128xf32>
    %207 = arith.negf %206 : vector<16x128xf32>
    %208 = math.exp %207 : vector<16x128xf32>
    %cst_51 = arith.constant 1.000000e+00 : f32
    %209 = vector.broadcast %cst_51 : f32 to vector<16x128xf32>
    %210 = arith.addf %209, %208 : vector<16x128xf32>
    %211 = arith.divf %209, %210 : vector<16x128xf32>
    %212 = arith.mulf %203, %178 : vector<16x128xf32>
    %213 = arith.mulf %197, %205 : vector<16x128xf32>
    %214 = arith.addf %212, %213 : vector<16x128xf32>
    %215 = math.tanh %214 : vector<16x128xf32>
    %216 = arith.mulf %211, %215 : vector<16x128xf32>
    %217 = arith.truncf %216 : vector<16x128xf32> to vector<16x128xbf16>
    %218 = arith.index_cast %c5_i32 : i32 to index
    %c0_52 = arith.constant 0 : index
    %c0_53 = arith.constant 0 : index
    %219 = vector.load %arg4[%218, %c0_52, %c0_53] : memref<8x16x128xbf16, #tpu.memory_space<vmem>>, vector<1x16x128xbf16>
    %220 = vector.shape_cast %219 : vector<1x16x128xbf16> to vector<16x128xbf16>
    %221 = vector.shape_cast %217 : vector<16x128xbf16> to vector<1x16x128xbf16>
    tpu.vector_store %arg4[%218, %c0_52, %c0_53], %221 {strides = array<i32>} : memref<8x16x128xbf16, #tpu.memory_space<vmem>>, vector<1x16x128xbf16>,
    %c6_i32 = arith.constant 6 : i32
    %222 = arith.index_cast %c6_i32 : i32 to index
    %c0_54 = arith.constant 0 : index
    %c0_55 = arith.constant 0 : index
    %223 = vector.load %arg2[%222, %c0_54, %c0_55] : memref<8x16x512xf32, #tpu.memory_space<vmem>>, vector<1x16x512xf32>
    %224 = vector.shape_cast %223 : vector<1x16x512xf32> to vector<16x512xf32>
    %225 = arith.truncf %216 : vector<16x128xf32> to vector<16x128xbf16>
    %cst_56 = arith.constant dense<0.000000e+00> : vector<16x512xf32>
    %226 = tpu.matmul %225, %3, %cst_56 {dimension_numbers = #tpu.dot_dimension_numbers<[1], [0], [0], [1], [0, 0, 1, 1], [], []>} : vector<16x128xbf16>, vector<128x512xbf16>, vector<16x512xf32> -> vector<16x512xf32>
    %227 = arith.addf %224, %226 : vector<16x512xf32>
    %228 = vector.extract_strided_slice %227 {offsets = [0, 0], sizes = [16, 128], strides = [1, 1]} : vector<16x512xf32> to vector<16x128xf32>
    %229 = arith.negf %228 : vector<16x128xf32>
    %230 = math.exp %229 : vector<16x128xf32>
    %cst_57 = arith.constant 1.000000e+00 : f32
    %231 = vector.broadcast %cst_57 : f32 to vector<16x128xf32>
    %232 = arith.addf %231, %230 : vector<16x128xf32>
    %233 = arith.divf %231, %232 : vector<16x128xf32>
    %234 = vector.extract_strided_slice %227 {offsets = [0, 128], sizes = [16, 128], strides = [1, 1]} : vector<16x512xf32> to vector<16x128xf32>
    %235 = arith.negf %234 : vector<16x128xf32>
    %236 = math.exp %235 : vector<16x128xf32>
    %cst_58 = arith.constant 1.000000e+00 : f32
    %237 = vector.broadcast %cst_58 : f32 to vector<16x128xf32>
    %238 = arith.addf %237, %236 : vector<16x128xf32>
    %239 = arith.divf %237, %238 : vector<16x128xf32>
    %240 = vector.extract_strided_slice %227 {offsets = [0, 256], sizes = [16, 128], strides = [1, 1]} : vector<16x512xf32> to vector<16x128xf32>
    %241 = math.tanh %240 : vector<16x128xf32>
    %242 = vector.extract_strided_slice %227 {offsets = [0, 384], sizes = [16, 128], strides = [1, 1]} : vector<16x512xf32> to vector<16x128xf32>
    %243 = arith.negf %242 : vector<16x128xf32>
    %244 = math.exp %243 : vector<16x128xf32>
    %cst_59 = arith.constant 1.000000e+00 : f32
    %245 = vector.broadcast %cst_59 : f32 to vector<16x128xf32>
    %246 = arith.addf %245, %244 : vector<16x128xf32>
    %247 = arith.divf %245, %246 : vector<16x128xf32>
    %248 = arith.mulf %239, %214 : vector<16x128xf32>
    %249 = arith.mulf %233, %241 : vector<16x128xf32>
    %250 = arith.addf %248, %249 : vector<16x128xf32>
    %251 = math.tanh %250 : vector<16x128xf32>
    %252 = arith.mulf %247, %251 : vector<16x128xf32>
    %253 = arith.truncf %252 : vector<16x128xf32> to vector<16x128xbf16>
    %254 = arith.index_cast %c6_i32 : i32 to index
    %c0_60 = arith.constant 0 : index
    %c0_61 = arith.constant 0 : index
    %255 = vector.load %arg4[%254, %c0_60, %c0_61] : memref<8x16x128xbf16, #tpu.memory_space<vmem>>, vector<1x16x128xbf16>
    %256 = vector.shape_cast %255 : vector<1x16x128xbf16> to vector<16x128xbf16>
    %257 = vector.shape_cast %253 : vector<16x128xbf16> to vector<1x16x128xbf16>
    tpu.vector_store %arg4[%254, %c0_60, %c0_61], %257 {strides = array<i32>} : memref<8x16x128xbf16, #tpu.memory_space<vmem>>, vector<1x16x128xbf16>,
    %c7_i32 = arith.constant 7 : i32
    %258 = arith.index_cast %c7_i32 : i32 to index
    %c0_62 = arith.constant 0 : index
    %c0_63 = arith.constant 0 : index
    %259 = vector.load %arg2[%258, %c0_62, %c0_63] : memref<8x16x512xf32, #tpu.memory_space<vmem>>, vector<1x16x512xf32>
    %260 = vector.shape_cast %259 : vector<1x16x512xf32> to vector<16x512xf32>
    %261 = arith.truncf %252 : vector<16x128xf32> to vector<16x128xbf16>
    %cst_64 = arith.constant dense<0.000000e+00> : vector<16x512xf32>
    %262 = tpu.matmul %261, %3, %cst_64 {dimension_numbers = #tpu.dot_dimension_numbers<[1], [0], [0], [1], [0, 0, 1, 1], [], []>} : vector<16x128xbf16>, vector<128x512xbf16>, vector<16x512xf32> -> vector<16x512xf32>
    %263 = arith.addf %260, %262 : vector<16x512xf32>
    %264 = vector.extract_strided_slice %263 {offsets = [0, 0], sizes = [16, 128], strides = [1, 1]} : vector<16x512xf32> to vector<16x128xf32>
    %265 = arith.negf %264 : vector<16x128xf32>
    %266 = math.exp %265 : vector<16x128xf32>
    %cst_65 = arith.constant 1.000000e+00 : f32
    %267 = vector.broadcast %cst_65 : f32 to vector<16x128xf32>
    %268 = arith.addf %267, %266 : vector<16x128xf32>
    %269 = arith.divf %267, %268 : vector<16x128xf32>
    %270 = vector.extract_strided_slice %263 {offsets = [0, 128], sizes = [16, 128], strides = [1, 1]} : vector<16x512xf32> to vector<16x128xf32>
    %271 = arith.negf %270 : vector<16x128xf32>
    %272 = math.exp %271 : vector<16x128xf32>
    %cst_66 = arith.constant 1.000000e+00 : f32
    %273 = vector.broadcast %cst_66 : f32 to vector<16x128xf32>
    %274 = arith.addf %273, %272 : vector<16x128xf32>
    %275 = arith.divf %273, %274 : vector<16x128xf32>
    %276 = vector.extract_strided_slice %263 {offsets = [0, 256], sizes = [16, 128], strides = [1, 1]} : vector<16x512xf32> to vector<16x128xf32>
    %277 = math.tanh %276 : vector<16x128xf32>
    %278 = vector.extract_strided_slice %263 {offsets = [0, 384], sizes = [16, 128], strides = [1, 1]} : vector<16x512xf32> to vector<16x128xf32>
    %279 = arith.negf %278 : vector<16x128xf32>
    %280 = math.exp %279 : vector<16x128xf32>
    %cst_67 = arith.constant 1.000000e+00 : f32
    %281 = vector.broadcast %cst_67 : f32 to vector<16x128xf32>
    %282 = arith.addf %281, %280 : vector<16x128xf32>
    %283 = arith.divf %281, %282 : vector<16x128xf32>
    %284 = arith.mulf %275, %250 : vector<16x128xf32>
    %285 = arith.mulf %269, %277 : vector<16x128xf32>
    %286 = arith.addf %284, %285 : vector<16x128xf32>
    %287 = math.tanh %286 : vector<16x128xf32>
    %288 = arith.mulf %283, %287 : vector<16x128xf32>
    %289 = arith.truncf %288 : vector<16x128xf32> to vector<16x128xbf16>
    %290 = arith.index_cast %c7_i32 : i32 to index
    %c0_68 = arith.constant 0 : index
    %c0_69 = arith.constant 0 : index
    %291 = vector.load %arg4[%290, %c0_68, %c0_69] : memref<8x16x128xbf16, #tpu.memory_space<vmem>>, vector<1x16x128xbf16>
    %292 = vector.shape_cast %291 : vector<1x16x128xbf16> to vector<16x128xbf16>
    %293 = vector.shape_cast %289 : vector<16x128xbf16> to vector<1x16x128xbf16>
    tpu.vector_store %arg4[%290, %c0_68, %c0_69], %293 {strides = array<i32>} : memref<8x16x128xbf16, #tpu.memory_space<vmem>>, vector<1x16x128xbf16>,
    %c8_i32 = arith.constant 8 : i32
    %c0_70 = arith.constant 0 : index
    %c0_71 = arith.constant 0 : index
    %294 = vector.load %arg5[%c0_70, %c0_71] : memref<16x128xf32, #tpu.memory_space<vmem>>, vector<16x128xf32>
    tpu.vector_store %arg5[%c0_70, %c0_71], %288 {strides = array<i32>} : memref<16x128xf32, #tpu.memory_space<vmem>>, vector<16x128xf32>,
    %c0_72 = arith.constant 0 : index
    %c0_73 = arith.constant 0 : index
    %295 = vector.load %arg6[%c0_72, %c0_73] : memref<16x128xf32, #tpu.memory_space<vmem>>, vector<16x128xf32>
    tpu.vector_store %arg6[%c0_72, %c0_73], %286 {strides = array<i32>} : memref<16x128xf32, #tpu.memory_space<vmem>>, vector<16x128xf32>,
    return
  }
  func.func @transform_0(%arg0: i32, %arg1: i32) -> (i32, i32, i32) {
    %c0_i32 = arith.constant 0 : i32
    %c0_i32_0 = arith.constant 0 : i32
    return %arg1, %arg0, %c0_i32 : i32, i32, i32
  }
  func.func @transform_1(%arg0: i32, %arg1: i32) -> (i32, i32) {
    %c0_i32 = arith.constant 0 : i32
    %c0_i32_0 = arith.constant 0 : i32
    %c0_i32_1 = arith.constant 0 : i32
    return %c0_i32, %c0_i32_0 : i32, i32
  }
  func.func @transform_2(%arg0: i32, %arg1: i32) -> (i32, i32, i32) {
    %c0_i32 = arith.constant 0 : i32
    %c0_i32_0 = arith.constant 0 : i32
    return %arg1, %arg0, %c0_i32 : i32, i32, i32
  }
}

module attributes {stable_mosaic.version = 11 : i64} {
  func.func @fc_kernel(%arg0: i32, %arg1: memref<16x128xbf16, #tpu.memory_space<vmem>>, %arg2: memref<128x128xbf16, #tpu.memory_space<vmem>>, %arg3: memref<1x128xf32, #tpu.memory_space<vmem>>, %arg4: memref<16x128xf32, #tpu.memory_space<vmem>>) attributes {dimension_semantics = [#tpu.dimension_semantics<parallel>], iteration_bounds = array<i64: 1>, scalar_prefetch = 0 : i64, scratch_operands = 0 : i64, tpu.core_type = #tpu.core_type<tc>, window_params = [{pipeline_mode = #tpu.pipeline_mode<synchronous>, transform_indices = @transform_0, window_bounds = array<i64: 16, 128>}, {transform_indices = @transform_1, window_bounds = array<i64: 128, 128>}, {transform_indices = @transform_2, window_bounds = array<i64: 1, 128>}, {transform_indices = @transform_3, window_bounds = array<i64: 16, 128>}]} {
    %c0 = arith.constant 0 : index
    %c0_0 = arith.constant 0 : index
    %0 = vector.load %arg1[%c0, %c0_0] : memref<16x128xbf16, #tpu.memory_space<vmem>>, vector<16x128xbf16>
    %c0_1 = arith.constant 0 : index
    %c0_2 = arith.constant 0 : index
    %1 = vector.load %arg2[%c0_1, %c0_2] : memref<128x128xbf16, #tpu.memory_space<vmem>>, vector<128x128xbf16>
    %cst = arith.constant dense<0.000000e+00> : vector<16x128xf32>
    %2 = tpu.matmul %0, %1, %cst {dimension_numbers = #tpu.dot_dimension_numbers<[1], [0], [0], [1], [0, 0, 1, 1], [], []>} : vector<16x128xbf16>, vector<128x128xbf16>, vector<16x128xf32> -> vector<16x128xf32>
    %c0_3 = arith.constant 0 : index
    %c0_4 = arith.constant 0 : index
    %3 = vector.load %arg3[%c0_3, %c0_4] : memref<1x128xf32, #tpu.memory_space<vmem>>, vector<1x128xf32>
    %4 = vector.broadcast %3 : vector<1x128xf32> to vector<16x128xf32>
    %5 = arith.addf %2, %4 : vector<16x128xf32>
    %c0_5 = arith.constant 0 : index
    %c0_6 = arith.constant 0 : index
    %6 = vector.load %arg4[%c0_5, %c0_6] : memref<16x128xf32, #tpu.memory_space<vmem>>, vector<16x128xf32>
    tpu.vector_store %arg4[%c0_5, %c0_6], %5 {strides = array<i32>} : memref<16x128xf32, #tpu.memory_space<vmem>>, vector<16x128xf32>,
    return
  }
  func.func @transform_0(%arg0: i32) -> (i32, i32) {
    %c0_i32 = arith.constant 0 : i32
    %c0_i32_0 = arith.constant 0 : i32
    %c0_i32_1 = arith.constant 0 : i32
    return %c0_i32, %c0_i32_0 : i32, i32
  }
  func.func @transform_1(%arg0: i32) -> (i32, i32) {
    %c0_i32 = arith.constant 0 : i32
    %c0_i32_0 = arith.constant 0 : i32
    return %c0_i32, %arg0 : i32, i32
  }
  func.func @transform_2(%arg0: i32) -> (i32, i32) {
    %c0_i32 = arith.constant 0 : i32
    %c0_i32_0 = arith.constant 0 : i32
    return %c0_i32, %arg0 : i32, i32
  }
  func.func @transform_3(%arg0: i32) -> (i32, i32) {
    %c0_i32 = arith.constant 0 : i32
    %c0_i32_0 = arith.constant 0 : i32
    return %c0_i32, %arg0 : i32, i32
  }
}

</mosaic_0001>

<llo_original>
// kernel: lstm_model_forward.3
$region0: #{lstm_model_forward.3}
  #allocation0 [shape = 'u32[]', space=smem, size = 0x4, offset = 0x4, fixed_abs, tag = 'smem constant byte address 0x4 - core index']
  #allocation1 [shape = 'u32[144,128]{1,0:T(1,128)}', space=vmem, size = 0x12000, scoped, tag = 'internal scratch']
  %s0 = inlined_call_operand.vmem [shape: bf16[128,128], index: 0, kind: input, shape index: {}]
  %s1 = inlined_call_operand.vmem [shape: bf16[128,512], index: 1, kind: input, shape index: {}]
  %s2 = inlined_call_operand.vmem [shape: f32[1,512], index: 2, kind: input, shape index: {}]
  %s3 = inlined_call_operand.vmem [shape: f32[128,512], index: 3, kind: output, shape index: {}]
  %s4 = sld [smem:[#allocation0]]
  $region22: #{lstm_model_forward.3} parent=0
    _
  %s6 = ssub.s32 1, %s4
  %s7 = scalar_select 0, %s6, %s4
  // Predicated region
  $region2: #{lstm_model_forward.3} parent=0 // pred_check
    _
  $region3: #{lstm_model_forward.3} parent=0 // pred_check_branch
    %9 = sbr.rel (0) target = $region5
  $region4: #{lstm_model_forward.3} parent=0 // pred_region
    _
  $region5: #{lstm_model_forward.3} parent=0 // pred_fallthru
    _
  // Predicated region
  $region6: #{lstm_model_forward.3} parent=0 // pred_check
    _
  $region7: #{lstm_model_forward.3} parent=0 // pred_check_branch
    %11 = sbr.rel (0) target = $region9
  $region8: #{lstm_model_forward.3} parent=0 // pred_region
    _
  $region9: #{lstm_model_forward.3} parent=0 // pred_fallthru
    _
  // Predicated region
  $region10: #{lstm_model_forward.3} parent=0 // pred_check
    _
  $region11: #{lstm_model_forward.3} parent=0 // pred_check_branch
    %13 = sbr.rel (0) target = $region13
  $region12: #{lstm_model_forward.3} parent=0 // pred_region
    _
  $region13: #{lstm_model_forward.3} parent=0 // pred_fallthru
    _
  %v15 = vld [vmem:[%s0] sm:$0xf]
  %v16 = vld [vmem:[%s0 + $0x4] sm:$0xf]
  %v17 = vld [vmem:[%s0 + $0x8] sm:$0xf]
  %v18 = vld [vmem:[%s0 + $0xc] sm:$0xf]
  %v19 = vld [vmem:[%s0 + $0x10] sm:$0xf]
  %v20 = vld [vmem:[%s0 + $0x14] sm:$0xf]
  %v21 = vld [vmem:[%s0 + $0x18] sm:$0xf]
  %v22 = vld [vmem:[%s0 + $0x1c] sm:$0xf]
  %v23 = vld [vmem:[%s0 + $0x20] sm:$0xf]
  %v24 = vld [vmem:[%s0 + $0x24] sm:$0xf]
  %v25 = vld [vmem:[%s0 + $0x28] sm:$0xf]
  %v26 = vld [vmem:[%s0 + $0x2c] sm:$0xf]
  %v27 = vld [vmem:[%s0 + $0x30] sm:$0xf]
  %v28 = vld [vmem:[%s0 + $0x34] sm:$0xf]
  %v29 = vld [vmem:[%s0 + $0x38] sm:$0xf]
  %v30 = vld [vmem:[%s0 + $0x3c] sm:$0xf]
  %v31 = vld [vmem:[%s1] sm:$0xff]
  %v32 = vld [vmem:[%s1 + $0x8] sm:$0xff]
  %v33 = vld [vmem:[%s1 + $0x10] sm:$0xff]
  %v34 = vld [vmem:[%s1 + $0x18] sm:$0xff]
  %v35 = vld [vmem:[%s1 + $0x20] sm:$0xff]
  %v36 = vld [vmem:[%s1 + $0x28] sm:$0xff]
  %v37 = vld [vmem:[%s1 + $0x30] sm:$0xff]
  %v38 = vld [vmem:[%s1 + $0x38] sm:$0xff]
  %v39 = vld [vmem:[%s1 + $0x40] sm:$0xff]
  %v40 = vld [vmem:[%s1 + $0x48] sm:$0xff]
  %v41 = vld [vmem:[%s1 + $0x50] sm:$0xff]
  %v42 = vld [vmem:[%s1 + $0x58] sm:$0xff]
  %v43 = vld [vmem:[%s1 + $0x60] sm:$0xff]
  %v44 = vld [vmem:[%s1 + $0x68] sm:$0xff]
  %v45 = vld [vmem:[%s1 + $0x70] sm:$0xff]
  %v46 = vld [vmem:[%s1 + $0x78] sm:$0xff]
  %v47 = vld [vmem:[%s1 + $0x80] sm:$0xff]
  %v48 = vld [vmem:[%s1 + $0x88] sm:$0xff]
  %v49 = vld [vmem:[%s1 + $0x90] sm:$0xff]
  %v50 = vld [vmem:[%s1 + $0x98] sm:$0xff]
  %v51 = vld [vmem:[%s1 + $0xa0] sm:$0xff]
  %v52 = vld [vmem:[%s1 + $0xa8] sm:$0xff]
  %v53 = vld [vmem:[%s1 + $0xb0] sm:$0xff]
  %v54 = vld [vmem:[%s1 + $0xb8] sm:$0xff]
  %v55 = vld [vmem:[%s1 + $0xc0] sm:$0xff]
  %v56 = vld [vmem:[%s1 + $0xc8] sm:$0xff]
  %v57 = vld [vmem:[%s1 + $0xd0] sm:$0xff]
  %v58 = vld [vmem:[%s1 + $0xd8] sm:$0xff]
  %v59 = vld [vmem:[%s1 + $0xe0] sm:$0xff]
  %v60 = vld [vmem:[%s1 + $0xe8] sm:$0xff]
  %v61 = vld [vmem:[%s1 + $0xf0] sm:$0xff]
  %v62 = vld [vmem:[%s1 + $0xf8] sm:$0xff]
  %v63 = vld [vmem:[%s2] sm:$0xf]
  %v65 = vlaneseq
  %v66 = vshrl.u32 %v65, 7
  %v67 = vsub.s32 0, %v66
  %v68 = vrot.slane %v63, %v67
  %v69 = vlaneseq
  %v70 = vshrl.u32 %v69, 7
  %v71 = vsub.s32 1, %v70
  %v72 = vrot.slane %v63, %v71
  %v73 = vlaneseq
  %v74 = vshrl.u32 %v73, 7
  %v75 = vsub.s32 2, %v74
  %v76 = vrot.slane %v63, %v75
  %v77 = vlaneseq
  %v78 = vshrl.u32 %v77, 7
  %v79 = vsub.s32 3, %v78
  %v80 = vrot.slane %v63, %v79
  %v101 = vunpack.c.l.b16 %v15
  %v102 = vunpack.c.l.b16 %v16
  %v103 = vunpack.c.l.b16 %v17
  %v104 = vunpack.c.l.b16 %v18
  %v105 = vunpack.c.l.b16 %v19
  %v106 = vunpack.c.l.b16 %v20
  %v107 = vunpack.c.l.b16 %v21
  %v108 = vunpack.c.l.b16 %v22
  %v109 = vunpack.c.l.b16 %v23
  %v110 = vunpack.c.l.b16 %v24
  %v111 = vunpack.c.l.b16 %v25
  %v112 = vunpack.c.l.b16 %v26
  %v113 = vunpack.c.l.b16 %v27
  %v114 = vunpack.c.l.b16 %v28
  %v115 = vunpack.c.l.b16 %v29
  %v116 = vunpack.c.l.b16 %v30
  %v117 = vpack.c.b16 %v102, %v101
  %v118 = vpack.c.b16 %v104, %v103
  %v119 = vpack.c.b16 %v106, %v105
  %v120 = vpack.c.b16 %v108, %v107
  %v121 = vpack.c.b16 %v110, %v109
  %v122 = vpack.c.b16 %v112, %v111
  %v123 = vpack.c.b16 %v114, %v113
  %v124 = vpack.c.b16 %v116, %v115
  %v165 = vunpack.c.l.b16 %v31
  %v166 = vunpack.c.h.b16 %v31
  %v167 = vunpack.c.l.b16 %v32
  %v168 = vunpack.c.h.b16 %v32
  %v169 = vunpack.c.l.b16 %v33
  %v170 = vunpack.c.h.b16 %v33
  %v171 = vunpack.c.l.b16 %v34
  %v172 = vunpack.c.h.b16 %v34
  %v173 = vunpack.c.l.b16 %v35
  %v174 = vunpack.c.h.b16 %v35
  %v175 = vunpack.c.l.b16 %v36
  %v176 = vunpack.c.h.b16 %v36
  %v177 = vunpack.c.l.b16 %v37
  %v178 = vunpack.c.h.b16 %v37
  %v179 = vunpack.c.l.b16 %v38
  %v180 = vunpack.c.h.b16 %v38
  %v181 = vunpack.c.l.b16 %v39
  %v182 = vunpack.c.h.b16 %v39
  %v183 = vunpack.c.l.b16 %v40
  %v184 = vunpack.c.h.b16 %v40
  %v185 = vunpack.c.l.b16 %v41
  %v186 = vunpack.c.h.b16 %v41
  %v187 = vunpack.c.l.b16 %v42
  %v188 = vunpack.c.h.b16 %v42
  %v189 = vunpack.c.l.b16 %v43
  %v190 = vunpack.c.h.b16 %v43
  %v191 = vunpack.c.l.b16 %v44
  %v192 = vunpack.c.h.b16 %v44
  %v193 = vunpack.c.l.b16 %v45
  %v194 = vunpack.c.h.b16 %v45
  %v195 = vunpack.c.l.b16 %v46
  %v196 = vunpack.c.h.b16 %v46
  %v197 = vunpack.c.l.b16 %v47
  %v198 = vunpack.c.h.b16 %v47
  %v199 = vunpack.c.l.b16 %v48
  %v200 = vunpack.c.h.b16 %v48
  %v201 = vunpack.c.l.b16 %v49
  %v202 = vunpack.c.h.b16 %v49
  %v203 = vunpack.c.l.b16 %v50
  %v204 = vunpack.c.h.b16 %v50
  %v205 = vunpack.c.l.b16 %v51
  %v206 = vunpack.c.h.b16 %v51
  %v207 = vunpack.c.l.b16 %v52
  %v208 = vunpack.c.h.b16 %v52
  %v209 = vunpack.c.l.b16 %v53
  %v210 = vunpack.c.h.b16 %v53
  %v211 = vunpack.c.l.b16 %v54
  %v212 = vunpack.c.h.b16 %v54
  %v213 = vunpack.c.l.b16 %v55
  %v214 = vunpack.c.h.b16 %v55
  %v215 = vunpack.c.l.b16 %v56
  %v216 = vunpack.c.h.b16 %v56
  %v217 = vunpack.c.l.b16 %v57
  %v218 = vunpack.c.h.b16 %v57
  %v219 = vunpack.c.l.b16 %v58
  %v220 = vunpack.c.h.b16 %v58
  %v221 = vunpack.c.l.b16 %v59
  %v222 = vunpack.c.h.b16 %v59
  %v223 = vunpack.c.l.b16 %v60
  %v224 = vunpack.c.h.b16 %v60
  %v225 = vunpack.c.l.b16 %v61
  %v226 = vunpack.c.h.b16 %v61
  %v227 = vunpack.c.l.b16 %v62
  %v228 = vunpack.c.h.b16 %v62
  %v229 = vpack.c.b16 %v169, %v165
  %v230 = vpack.c.b16 %v170, %v166
  %v231 = vpack.c.b16 %v171, %v167
  %v232 = vpack.c.b16 %v172, %v168
  %v233 = vpack.c.b16 %v177, %v173
  %v234 = vpack.c.b16 %v178, %v174
  %v235 = vpack.c.b16 %v179, %v175
  %v236 = vpack.c.b16 %v180, %v176
  %v237 = vpack.c.b16 %v185, %v181
  %v238 = vpack.c.b16 %v186, %v182
  %v239 = vpack.c.b16 %v187, %v183
  %v240 = vpack.c.b16 %v188, %v184
  %v241 = vpack.c.b16 %v193, %v189
  %v242 = vpack.c.b16 %v194, %v190
  %v243 = vpack.c.b16 %v195, %v191
  %v244 = vpack.c.b16 %v196, %v192
  %v245 = vpack.c.b16 %v201, %v197
  %v246 = vpack.c.b16 %v202, %v198
  %v247 = vpack.c.b16 %v203, %v199
  %v248 = vpack.c.b16 %v204, %v200
  %v249 = vpack.c.b16 %v209, %v205
  %v250 = vpack.c.b16 %v210, %v206
  %v251 = vpack.c.b16 %v211, %v207
  %v252 = vpack.c.b16 %v212, %v208
  %v253 = vpack.c.b16 %v217, %v213
  %v254 = vpack.c.b16 %v218, %v214
  %v255 = vpack.c.b16 %v219, %v215
  %v256 = vpack.c.b16 %v220, %v216
  %v257 = vpack.c.b16 %v225, %v221
  %v258 = vpack.c.b16 %v226, %v222
  %v259 = vpack.c.b16 %v227, %v223
  %v260 = vpack.c.b16 %v228, %v224
  %293 = vmatprep.subr.bf16.mxu0 %v230
  %294 = vmatpush1.bf16.msra.mxu0 %v229
  %295 = vmatprep.subr.bf16.mxu0 %v234
  %296 = vmatpush1.bf16.msra.mxu0 %v233
  %297 = vmatprep.subr.bf16.mxu0 %v238
  %298 = vmatpush1.bf16.msra.mxu0 %v237
  %299 = vmatprep.subr.bf16.mxu0 %v242
  %300 = vmatpush1.bf16.msra.mxu0 %v241
  %301 = vmatprep.subr.bf16.mxu0 %v246
  %302 = vmatpush1.bf16.msra.mxu0 %v245
  %303 = vmatprep.subr.bf16.mxu0 %v250
  %304 = vmatpush1.bf16.msra.mxu0 %v249
  %305 = vmatprep.subr.bf16.mxu0 %v254
  %306 = vmatpush1.bf16.msra.mxu0 %v253
  %307 = vmatprep.subr.bf16.mxu0 %v258
  %308 = vmatpush1.bf16.msra.mxu0 %v257
  %309 = vmatprep.subr.bf16.mxu0 0
  %310 = vmatpush1.bf16.msra.mxu0 0
  %311 = vmatprep.subr.bf16.mxu0 0
  %312 = vmatpush1.bf16.msra.mxu0 0
  %313 = vmatprep.subr.bf16.mxu0 0
  %314 = vmatpush1.bf16.msra.mxu0 0
  %315 = vmatprep.subr.bf16.mxu0 0
  %316 = vmatpush1.bf16.msra.mxu0 0
  %317 = vmatprep.subr.bf16.mxu0 0
  %318 = vmatpush1.bf16.msra.mxu0 0
  %319 = vmatprep.subr.bf16.mxu0 0
  %320 = vmatpush1.bf16.msra.mxu0 0
  %321 = vmatprep.subr.bf16.mxu0 0
  %322 = vmatpush1.bf16.msra.mxu0 0
  %323 = vmatprep.subr.bf16.mxu0 0
  %324 = vmatpush1.bf16.msra.mxu0 0
  %325 = vmatprep.mubr.bf16.mxu0 0
  %326 = vmatmul.mubr.bf16.gmra.mrb[0].mxu0 %v117
  %v327 = vpop.f32.mrb[0].mxu0
  %v328 = vadd.f32 %v68, %v327
  %v329 = vpop.f32.mrb[0].mxu0
  %v330 = vadd.f32 %v72, %v329
  %v331 = vpop.f32.mrb[0].mxu0
  %v332 = vadd.f32 %v68, %v331
  %v333 = vpop.f32.mrb[0].mxu0
  %v334 = vadd.f32 %v72, %v333
  %335 = vmatprep.mubr.bf16.mxu0 0
  %336 = vmatmul.mubr.bf16.gmra.mrb[0].mxu0 %v118
  %v337 = vpop.f32.mrb[0].mxu0
  %v338 = vadd.f32 %v68, %v337
  %v339 = vpop.f32.mrb[0].mxu0
  %v340 = vadd.f32 %v72, %v339
  %v341 = vpop.f32.mrb[0].mxu0
  %v342 = vadd.f32 %v68, %v341
  %v343 = vpop.f32.mrb[0].mxu0
  %v344 = vadd.f32 %v72, %v343
  %345 = vmatprep.mubr.bf16.mxu0 0
  %346 = vmatmul.mubr.bf16.gmra.mrb[0].mxu0 %v119
  %v347 = vpop.f32.mrb[0].mxu0
  %v348 = vadd.f32 %v68, %v347
  %v349 = vpop.f32.mrb[0].mxu0
  %v350 = vadd.f32 %v72, %v349
  %v351 = vpop.f32.mrb[0].mxu0
  %v352 = vadd.f32 %v68, %v351
  %v353 = vpop.f32.mrb[0].mxu0
  %v354 = vadd.f32 %v72, %v353
  %355 = vmatprep.mubr.bf16.mxu0 0
  %356 = vmatmul.mubr.bf16.gmra.mrb[0].mxu0 %v120
  %v357 = vpop.f32.mrb[0].mxu0
  %v358 = vadd.f32 %v68, %v357
  %v359 = vpop.f32.mrb[0].mxu0
  %v360 = vadd.f32 %v72, %v359
  %v361 = vpop.f32.mrb[0].mxu0
  %v362 = vadd.f32 %v68, %v361
  %v363 = vpop.f32.mrb[0].mxu0
  %v364 = vadd.f32 %v72, %v363
  %365 = vmatprep.mubr.bf16.mxu0 0
  %366 = vmatmul.mubr.bf16.gmra.mrb[0].mxu0 %v121
  %v367 = vpop.f32.mrb[0].mxu0
  %v368 = vadd.f32 %v68, %v367
  %v369 = vpop.f32.mrb[0].mxu0
  %v370 = vadd.f32 %v72, %v369
  %v371 = vpop.f32.mrb[0].mxu0
  %v372 = vadd.f32 %v68, %v371
  %v373 = vpop.f32.mrb[0].mxu0
  %v374 = vadd.f32 %v72, %v373
  %375 = vmatprep.mubr.bf16.mxu0 0
  %376 = vmatmul.mubr.bf16.gmra.mrb[0].mxu0 %v122
  %v377 = vpop.f32.mrb[0].mxu0
  %v378 = vadd.f32 %v68, %v377
  %v379 = vpop.f32.mrb[0].mxu0
  %v380 = vadd.f32 %v72, %v379
  %v381 = vpop.f32.mrb[0].mxu0
  %v382 = vadd.f32 %v68, %v381
  %v383 = vpop.f32.mrb[0].mxu0
  %v384 = vadd.f32 %v72, %v383
  %385 = vmatprep.mubr.bf16.mxu0 0
  %386 = vmatmul.mubr.bf16.gmra.mrb[0].mxu0 %v123
  %v387 = vpop.f32.mrb[0].mxu0
  %v388 = vadd.f32 %v68, %v387
  %v389 = vpop.f32.mrb[0].mxu0
  %v390 = vadd.f32 %v72, %v389
  %v391 = vpop.f32.mrb[0].mxu0
  %v392 = vadd.f32 %v68, %v391
  %v393 = vpop.f32.mrb[0].mxu0
  %v394 = vadd.f32 %v72, %v393
  %395 = vmatprep.mubr.bf16.mxu0 0
  %396 = vmatmul.mubr.bf16.gmra.mrb[0].mxu0 %v124
  %v397 = vpop.f32.mrb[0].mxu0
  %v398 = vadd.f32 %v68, %v397
  %v399 = vpop.f32.mrb[0].mxu0
  %v400 = vadd.f32 %v72, %v399
  %v401 = vpop.f32.mrb[0].mxu0
  %v402 = vadd.f32 %v68, %v401
  %v403 = vpop.f32.mrb[0].mxu0
  %v404 = vadd.f32 %v72, %v403
  %405 = vdwg.mxu0
  %406 = vmatprep.subr.bf16.mxu0 %v232
  %407 = vmatpush1.bf16.msra.mxu0 %v231
  %408 = vmatprep.subr.bf16.mxu0 %v236
  %409 = vmatpush1.bf16.msra.mxu0 %v235
  %410 = vmatprep.subr.bf16.mxu0 %v240
  %411 = vmatpush1.bf16.msra.mxu0 %v239
  %412 = vmatprep.subr.bf16.mxu0 %v244
  %413 = vmatpush1.bf16.msra.mxu0 %v243
  %414 = vmatprep.subr.bf16.mxu0 %v248
  %415 = vmatpush1.bf16.msra.mxu0 %v247
  %416 = vmatprep.subr.bf16.mxu0 %v252
  %417 = vmatpush1.bf16.msra.mxu0 %v251
  %418 = vmatprep.subr.bf16.mxu0 %v256
  %419 = vmatpush1.bf16.msra.mxu0 %v255
  %420 = vmatprep.subr.bf16.mxu0 %v260
  %421 = vmatpush1.bf16.msra.mxu0 %v259
  %422 = vmatprep.subr.bf16.mxu0 0
  %423 = vmatpush1.bf16.msra.mxu0 0
  %424 = vmatprep.subr.bf16.mxu0 0
  %425 = vmatpush1.bf16.msra.mxu0 0
  %426 = vmatprep.subr.bf16.mxu0 0
  %427 = vmatpush1.bf16.msra.mxu0 0
  %428 = vmatprep.subr.bf16.mxu0 0
  %429 = vmatpush1.bf16.msra.mxu0 0
  %430 = vmatprep.subr.bf16.mxu0 0
  %431 = vmatpush1.bf16.msra.mxu0 0
  %432 = vmatprep.subr.bf16.mxu0 0
  %433 = vmatpush1.bf16.msra.mxu0 0
  %434 = vmatprep.subr.bf16.mxu0 0
  %435 = vmatpush1.bf16.msra.mxu0 0
  %436 = vmatprep.subr.bf16.mxu0 0
  %437 = vmatpush1.bf16.msra.mxu0 0
  %438 = vmatprep.mubr.bf16.mxu0 0
  %439 = vmatmul.mubr.bf16.gmra.mrb[0].mxu0 %v117
  %v440 = vpop.f32.mrb[0].mxu0
  %v441 = vadd.f32 %v76, %v440
  %v442 = vpop.f32.mrb[0].mxu0
  %v443 = vadd.f32 %v80, %v442
  %v444 = vpop.f32.mrb[0].mxu0
  %v445 = vadd.f32 %v76, %v444
  %v446 = vpop.f32.mrb[0].mxu0
  %v447 = vadd.f32 %v80, %v446
  %448 = vmatprep.mubr.bf16.mxu0 0
  %449 = vmatmul.mubr.bf16.gmra.mrb[0].mxu0 %v118
  %v450 = vpop.f32.mrb[0].mxu0
  %v451 = vadd.f32 %v76, %v450
  %v452 = vpop.f32.mrb[0].mxu0
  %v453 = vadd.f32 %v80, %v452
  %v454 = vpop.f32.mrb[0].mxu0
  %v455 = vadd.f32 %v76, %v454
  %v456 = vpop.f32.mrb[0].mxu0
  %v457 = vadd.f32 %v80, %v456
  %458 = vmatprep.mubr.bf16.mxu0 0
  %459 = vmatmul.mubr.bf16.gmra.mrb[0].mxu0 %v119
  %v460 = vpop.f32.mrb[0].mxu0
  %v461 = vadd.f32 %v76, %v460
  %v462 = vpop.f32.mrb[0].mxu0
  %v463 = vadd.f32 %v80, %v462
  %v464 = vpop.f32.mrb[0].mxu0
  %v465 = vadd.f32 %v76, %v464
  %v466 = vpop.f32.mrb[0].mxu0
  %v467 = vadd.f32 %v80, %v466
  %468 = vmatprep.mubr.bf16.mxu0 0
  %469 = vmatmul.mubr.bf16.gmra.mrb[0].mxu0 %v120
  %v470 = vpop.f32.mrb[0].mxu0
  %v471 = vadd.f32 %v76, %v470
  %v472 = vpop.f32.mrb[0].mxu0
  %v473 = vadd.f32 %v80, %v472
  %v474 = vpop.f32.mrb[0].mxu0
  %v475 = vadd.f32 %v76, %v474
  %v476 = vpop.f32.mrb[0].mxu0
  %v477 = vadd.f32 %v80, %v476
  %478 = vmatprep.mubr.bf16.mxu0 0
  %479 = vmatmul.mubr.bf16.gmra.mrb[0].mxu0 %v121
  %v480 = vpop.f32.mrb[0].mxu0
  %v481 = vadd.f32 %v76, %v480
  %v482 = vpop.f32.mrb[0].mxu0
  %v483 = vadd.f32 %v80, %v482
  %v484 = vpop.f32.mrb[0].mxu0
  %v485 = vadd.f32 %v76, %v484
  %v486 = vpop.f32.mrb[0].mxu0
  %v487 = vadd.f32 %v80, %v486
  %488 = vmatprep.mubr.bf16.mxu0 0
  %489 = vmatmul.mubr.bf16.gmra.mrb[0].mxu0 %v122
  %v490 = vpop.f32.mrb[0].mxu0
  %v491 = vadd.f32 %v76, %v490
  %v492 = vpop.f32.mrb[0].mxu0
  %v493 = vadd.f32 %v80, %v492
  %v494 = vpop.f32.mrb[0].mxu0
  %v495 = vadd.f32 %v76, %v494
  %v496 = vpop.f32.mrb[0].mxu0
  %v497 = vadd.f32 %v80, %v496
  %498 = vmatprep.mubr.bf16.mxu0 0
  %499 = vmatmul.mubr.bf16.gmra.mrb[0].mxu0 %v123
  %v500 = vpop.f32.mrb[0].mxu0
  %v501 = vadd.f32 %v76, %v500
  %v502 = vpop.f32.mrb[0].mxu0
  %v503 = vadd.f32 %v80, %v502
  %v504 = vpop.f32.mrb[0].mxu0
  %v505 = vadd.f32 %v76, %v504
  %v506 = vpop.f32.mrb[0].mxu0
  %v507 = vadd.f32 %v80, %v506
  %508 = vmatprep.mubr.bf16.mxu0 0
  %509 = vmatmul.mubr.bf16.gmra.mrb[0].mxu0 %v124
  %v510 = vpop.f32.mrb[0].mxu0
  %v511 = vadd.f32 %v76, %v510
  %v512 = vpop.f32.mrb[0].mxu0
  %v513 = vadd.f32 %v80, %v512
  %v514 = vpop.f32.mrb[0].mxu0
  %v515 = vadd.f32 %v76, %v514
  %v516 = vpop.f32.mrb[0].mxu0
  %v517 = vadd.f32 %v80, %v516
  %518 = vdwg.mxu0
  %519 = vst [vmem:[%s3] sm:$0xff] %v328
  %520 = vst [vmem:[%s3 + $0x8] sm:$0xff] %v330
  %521 = vst [vmem:[%s3 + $0x10] sm:$0xff] %v441
  %522 = vst [vmem:[%s3 + $0x18] sm:$0xff] %v443
  %523 = vst [vmem:[%s3 + $0x20] sm:$0xff] %v332
  %524 = vst [vmem:[%s3 + $0x28] sm:$0xff] %v334
  %525 = vst [vmem:[%s3 + $0x30] sm:$0xff] %v445
  %526 = vst [vmem:[%s3 + $0x38] sm:$0xff] %v447
  %527 = vst [vmem:[%s3 + $0x40] sm:$0xff] %v338
  %528 = vst [vmem:[%s3 + $0x48] sm:$0xff] %v340
  %529 = vst [vmem:[%s3 + $0x50] sm:$0xff] %v451
  %530 = vst [vmem:[%s3 + $0x58] sm:$0xff] %v453
  %531 = vst [vmem:[%s3 + $0x60] sm:$0xff] %v342
  %532 = vst [vmem:[%s3 + $0x68] sm:$0xff] %v344
  %533 = vst [vmem:[%s3 + $0x70] sm:$0xff] %v455
  %534 = vst [vmem:[%s3 + $0x78] sm:$0xff] %v457
  %535 = vst [vmem:[%s3 + $0x80] sm:$0xff] %v348
  %536 = vst [vmem:[%s3 + $0x88] sm:$0xff] %v350
  %537 = vst [vmem:[%s3 + $0x90] sm:$0xff] %v461
  %538 = vst [vmem:[%s3 + $0x98] sm:$0xff] %v463
  %539 = vst [vmem:[%s3 + $0xa0] sm:$0xff] %v352
  %540 = vst [vmem:[%s3 + $0xa8] sm:$0xff] %v354
  %541 = vst [vmem:[%s3 + $0xb0] sm:$0xff] %v465
  %542 = vst [vmem:[%s3 + $0xb8] sm:$0xff] %v467
  %543 = vst [vmem:[%s3 + $0xc0] sm:$0xff] %v358
  %544 = vst [vmem:[%s3 + $0xc8] sm:$0xff] %v360
  %545 = vst [vmem:[%s3 + $0xd0] sm:$0xff] %v471
  %546 = vst [vmem:[%s3 + $0xd8] sm:$0xff] %v473
  %547 = vst [vmem:[%s3 + $0xe0] sm:$0xff] %v362
  %548 = vst [vmem:[%s3 + $0xe8] sm:$0xff] %v364
  %549 = vst [vmem:[%s3 + $0xf0] sm:$0xff] %v475
  %550 = vst [vmem:[%s3 + $0xf8] sm:$0xff] %v477
  %551 = vst [vmem:[%s3 + $0x100] sm:$0xff] %v368
  %552 = vst [vmem:[%s3 + $0x108] sm:$0xff] %v370
  %553 = vst [vmem:[%s3 + $0x110] sm:$0xff] %v481
  %554 = vst [vmem:[%s3 + $0x118] sm:$0xff] %v483
  %555 = vst [vmem:[%s3 + $0x120] sm:$0xff] %v372
  %556 = vst [vmem:[%s3 + $0x128] sm:$0xff] %v374
  %557 = vst [vmem:[%s3 + $0x130] sm:$0xff] %v485
  %558 = vst [vmem:[%s3 + $0x138] sm:$0xff] %v487
  %559 = vst [vmem:[%s3 + $0x140] sm:$0xff] %v378
  %560 = vst [vmem:[%s3 + $0x148] sm:$0xff] %v380
  %561 = vst [vmem:[%s3 + $0x150] sm:$0xff] %v491
  %562 = vst [vmem:[%s3 + $0x158] sm:$0xff] %v493
  %563 = vst [vmem:[%s3 + $0x160] sm:$0xff] %v382
  %564 = vst [vmem:[%s3 + $0x168] sm:$0xff] %v384
  %565 = vst [vmem:[%s3 + $0x170] sm:$0xff] %v495
  %566 = vst [vmem:[%s3 + $0x178] sm:$0xff] %v497
  %567 = vst [vmem:[%s3 + $0x180] sm:$0xff] %v388
  %568 = vst [vmem:[%s3 + $0x188] sm:$0xff] %v390
  %569 = vst [vmem:[%s3 + $0x190] sm:$0xff] %v501
  %570 = vst [vmem:[%s3 + $0x198] sm:$0xff] %v503
  %571 = vst [vmem:[%s3 + $0x1a0] sm:$0xff] %v392
  %572 = vst [vmem:[%s3 + $0x1a8] sm:$0xff] %v394
  %573 = vst [vmem:[%s3 + $0x1b0] sm:$0xff] %v505
  %574 = vst [vmem:[%s3 + $0x1b8] sm:$0xff] %v507
  %575 = vst [vmem:[%s3 + $0x1c0] sm:$0xff] %v398
  %576 = vst [vmem:[%s3 + $0x1c8] sm:$0xff] %v400
  %577 = vst [vmem:[%s3 + $0x1d0] sm:$0xff] %v511
  %578 = vst [vmem:[%s3 + $0x1d8] sm:$0xff] %v513
  %579 = vst [vmem:[%s3 + $0x1e0] sm:$0xff] %v402
  %580 = vst [vmem:[%s3 + $0x1e8] sm:$0xff] %v404
  %581 = vst [vmem:[%s3 + $0x1f0] sm:$0xff] %v515
  %582 = vst [vmem:[%s3 + $0x1f8] sm:$0xff] %v517
  // Predicated region
  $region14: #{lstm_model_forward.3} parent=0 // pred_check
    _
  $region15: #{lstm_model_forward.3} parent=0 // pred_check_branch
    %584 = sbr.rel (0) target = $region17
  $region16: #{lstm_model_forward.3} parent=0 // pred_region
    _
  $region17: #{lstm_model_forward.3} parent=0 // pred_fallthru
    _
  // Predicated region
  $region18: #{lstm_model_forward.3} parent=0 // pred_check
    _
  $region19: #{lstm_model_forward.3} parent=0 // pred_check_branch
    %586 = sbr.rel (0) target = $region21
  $region20: #{lstm_model_forward.3} parent=0 // pred_region
    _
  $region21: #{lstm_model_forward.3} parent=0 // pred_fallthru
    _

// kernel: lstm_model_forward.5
$region0: #{lstm_model_forward.5}
  #allocation0 [shape = 'u32[]', space=smem, size = 0x4, offset = 0x4, fixed_abs, tag = 'smem constant byte address 0x4 - core index']
  #allocation1 [shape = 'u32[144,128]{1,0:T(1,128)}', space=vmem, size = 0x12000, scoped, tag = 'internal scratch']
  %s0 = inlined_call_operand.vmem [shape: bf16[16,128], index: 0, kind: input, shape index: {}]
  %s1 = inlined_call_operand.vmem [shape: bf16[128,128], index: 1, kind: input, shape index: {}]
  %s2 = inlined_call_operand.vmem [shape: f32[1,128], index: 2, kind: input, shape index: {}]
  %s3 = inlined_call_operand.vmem [shape: f32[16,128], index: 3, kind: output, shape index: {}]
  %s4 = sld [smem:[#allocation0]]
  $region22: #{lstm_model_forward.5} parent=0
    _
  %s6 = ssub.s32 1, %s4
  %s7 = scalar_select 0, %s6, %s4
  // Predicated region
  $region2: #{lstm_model_forward.5} parent=0 // pred_check
    _
  $region3: #{lstm_model_forward.5} parent=0 // pred_check_branch
    %9 = sbr.rel (0) target = $region5
  $region4: #{lstm_model_forward.5} parent=0 // pred_region
    _
  $region5: #{lstm_model_forward.5} parent=0 // pred_fallthru
    _
  // Predicated region
  $region6: #{lstm_model_forward.5} parent=0 // pred_check
    _
  $region7: #{lstm_model_forward.5} parent=0 // pred_check_branch
    %11 = sbr.rel (0) target = $region9
  $region8: #{lstm_model_forward.5} parent=0 // pred_region
    _
  $region9: #{lstm_model_forward.5} parent=0 // pred_fallthru
    _
  // Predicated region
  $region10: #{lstm_model_forward.5} parent=0 // pred_check
    _
  $region11: #{lstm_model_forward.5} parent=0 // pred_check_branch
    %13 = sbr.rel (0) target = $region13
  $region12: #{lstm_model_forward.5} parent=0 // pred_region
    _
  $region13: #{lstm_model_forward.5} parent=0 // pred_fallthru
    _
  %v15 = vld [vmem:[%s0] sm:$0xf]
  %v16 = vld [vmem:[%s0 + $0x4] sm:$0xf]
  %v17 = vld [vmem:[%s1] sm:$0xf]
  %v18 = vld [vmem:[%s1 + $0x4] sm:$0xf]
  %v19 = vld [vmem:[%s1 + $0x8] sm:$0xf]
  %v20 = vld [vmem:[%s1 + $0xc] sm:$0xf]
  %v21 = vld [vmem:[%s1 + $0x10] sm:$0xf]
  %v22 = vld [vmem:[%s1 + $0x14] sm:$0xf]
  %v23 = vld [vmem:[%s1 + $0x18] sm:$0xf]
  %v24 = vld [vmem:[%s1 + $0x1c] sm:$0xf]
  %v25 = vld [vmem:[%s1 + $0x20] sm:$0xf]
  %v26 = vld [vmem:[%s1 + $0x24] sm:$0xf]
  %v27 = vld [vmem:[%s1 + $0x28] sm:$0xf]
  %v28 = vld [vmem:[%s1 + $0x2c] sm:$0xf]
  %v29 = vld [vmem:[%s1 + $0x30] sm:$0xf]
  %v30 = vld [vmem:[%s1 + $0x34] sm:$0xf]
  %v31 = vld [vmem:[%s1 + $0x38] sm:$0xf]
  %v32 = vld [vmem:[%s1 + $0x3c] sm:$0xf]
  %v33 = vld [vmem:[%s2] sm:$0x1]
  %v35 = vlaneseq
  %v36 = vshrl.u32 %v35, 7
  %v37 = vsub.s32 0, %v36
  %v38 = vrot.slane %v33, %v37
  %v42 = vunpack.c.l.b16 %v15
  %v43 = vunpack.c.l.b16 %v16
  %v44 = vpack.c.b16 %v43, %v42
  %v62 = vunpack.c.l.b16 %v17
  %v63 = vunpack.c.l.b16 %v18
  %v64 = vunpack.c.l.b16 %v19
  %v65 = vunpack.c.l.b16 %v20
  %v66 = vunpack.c.l.b16 %v21
  %v67 = vunpack.c.l.b16 %v22
  %v68 = vunpack.c.l.b16 %v23
  %v69 = vunpack.c.l.b16 %v24
  %v70 = vunpack.c.l.b16 %v25
  %v71 = vunpack.c.l.b16 %v26
  %v72 = vunpack.c.l.b16 %v27
  %v73 = vunpack.c.l.b16 %v28
  %v74 = vunpack.c.l.b16 %v29
  %v75 = vunpack.c.l.b16 %v30
  %v76 = vunpack.c.l.b16 %v31
  %v77 = vunpack.c.l.b16 %v32
  %v78 = vpack.c.b16 %v63, %v62
  %v79 = vpack.c.b16 %v65, %v64
  %v80 = vpack.c.b16 %v67, %v66
  %v81 = vpack.c.b16 %v69, %v68
  %v82 = vpack.c.b16 %v71, %v70
  %v83 = vpack.c.b16 %v73, %v72
  %v84 = vpack.c.b16 %v75, %v74
  %v85 = vpack.c.b16 %v77, %v76
  %94 = vmatprep.subr.bf16.mxu0 0
  %95 = vmatpush1.bf16.msra.mxu0 %v78
  %96 = vmatprep.subr.bf16.mxu0 0
  %97 = vmatpush1.bf16.msra.mxu0 %v79
  %98 = vmatprep.subr.bf16.mxu0 0
  %99 = vmatpush1.bf16.msra.mxu0 %v80
  %100 = vmatprep.subr.bf16.mxu0 0
  %101 = vmatpush1.bf16.msra.mxu0 %v81
  %102 = vmatprep.subr.bf16.mxu0 0
  %103 = vmatpush1.bf16.msra.mxu0 %v82
  %104 = vmatprep.subr.bf16.mxu0 0
  %105 = vmatpush1.bf16.msra.mxu0 %v83
  %106 = vmatprep.subr.bf16.mxu0 0
  %107 = vmatpush1.bf16.msra.mxu0 %v84
  %108 = vmatprep.subr.bf16.mxu0 0
  %109 = vmatpush1.bf16.msra.mxu0 %v85
  %110 = vmatprep.subr.bf16.mxu0 0
  %111 = vmatpush1.bf16.msra.mxu0 0
  %112 = vmatprep.subr.bf16.mxu0 0
  %113 = vmatpush1.bf16.msra.mxu0 0
  %114 = vmatprep.subr.bf16.mxu0 0
  %115 = vmatpush1.bf16.msra.mxu0 0
  %116 = vmatprep.subr.bf16.mxu0 0
  %117 = vmatpush1.bf16.msra.mxu0 0
  %118 = vmatprep.subr.bf16.mxu0 0
  %119 = vmatpush1.bf16.msra.mxu0 0
  %120 = vmatprep.subr.bf16.mxu0 0
  %121 = vmatpush1.bf16.msra.mxu0 0
  %122 = vmatprep.subr.bf16.mxu0 0
  %123 = vmatpush1.bf16.msra.mxu0 0
  %124 = vmatprep.subr.bf16.mxu0 0
  %125 = vmatpush1.bf16.msra.mxu0 0
  %126 = vmatprep.mubr.bf16.mxu0 0
  %127 = vmatmul.mubr.bf16.gmra.mrb[0].mxu0 %v44
  %v128 = vpop.f32.mrb[0].mxu0
  %v129 = vadd.f32 %v38, %v128
  %v130 = vpop.f32.mrb[0].mxu0
  %v131 = vpop.f32.mrb[0].mxu0
  %v132 = vadd.f32 %v38, %v131
  %v133 = vpop.f32.mrb[0].mxu0
  %134 = vdwg.mxu0
  %135 = vst [vmem:[%s3] sm:$0xff] %v129
  %136 = vst [vmem:[%s3 + $0x8] sm:$0xff] %v132
  // Predicated region
  $region14: #{lstm_model_forward.5} parent=0 // pred_check
    _
  $region15: #{lstm_model_forward.5} parent=0 // pred_check_branch
    %138 = sbr.rel (0) target = $region17
  $region16: #{lstm_model_forward.5} parent=0 // pred_region
    _
  $region17: #{lstm_model_forward.5} parent=0 // pred_fallthru
    _
  // Predicated region
  $region18: #{lstm_model_forward.5} parent=0 // pred_check
    _
  $region19: #{lstm_model_forward.5} parent=0 // pred_check_branch
    %140 = sbr.rel (0) target = $region21
  $region20: #{lstm_model_forward.5} parent=0 // pred_region
    _
  $region21: #{lstm_model_forward.5} parent=0 // pred_fallthru
    _

// kernel: lstm_model_forward.4
$region0: #{lstm_model_forward.4}
  #allocation0 [shape = 'u32[]', space=smem, size = 0x4, offset = 0x4, fixed_abs, tag = 'smem constant byte address 0x4 - core index']
  #allocation1 [shape = 'u32[144,128]{1,0:T(1,128)}', space=vmem, size = 0x12000, scoped, tag = 'internal scratch']
  #allocation2 [shape = 'f32[16,128]{1,0:T(8,128)}', space=vmem, size = 0x2000, scoped, tag = 'scratch operand']
  #allocation3 [shape = 'f32[16,128]{1,0:T(8,128)}', space=vmem, size = 0x2000, scoped, tag = 'scratch operand']
  %s0 = inlined_call_operand.vmem [shape: f32[8,16,512], index: 0, kind: input, shape index: {}]
  %s1 = inlined_call_operand.vmem [shape: bf16[128,512], index: 1, kind: input, shape index: {}]
  %s2 = inlined_call_operand.vmem [shape: bf16[8,16,128], index: 2, kind: output, shape index: {}]
  %s3 = sld [smem:[#allocation0]]
  $region22: #{lstm_model_forward.4} parent=0
    _
  %s5 = ssub.s32 1, %s3
  %s6 = scalar_select 0, %s5, %s3
  // Predicated region
  $region2: #{lstm_model_forward.4} parent=0 // pred_check
    _
  $region3: #{lstm_model_forward.4} parent=0 // pred_check_branch
    %8 = sbr.rel (0) target = $region5
  $region4: #{lstm_model_forward.4} parent=0 // pred_region
    _
  $region5: #{lstm_model_forward.4} parent=0 // pred_fallthru
    _
  // Predicated region
  $region6: #{lstm_model_forward.4} parent=0 // pred_check
    _
  $region7: #{lstm_model_forward.4} parent=0 // pred_check_branch
    %10 = sbr.rel (0) target = $region9
  $region8: #{lstm_model_forward.4} parent=0 // pred_region
    _
  $region9: #{lstm_model_forward.4} parent=0 // pred_fallthru
    _
  %p12 = scmp.eq.s32.totalorder 0, 0
  // Predicated region
  $region10: #{lstm_model_forward.4} parent=0 // pred_check
    %p13 = pneg %p12
  $region11: #{lstm_model_forward.4} parent=0 // pred_check_branch
    %15 = sbr.rel (%p13) target = $region13
  $region12: #{lstm_model_forward.4} parent=0 // pred_region
    %16 = vst [vmem:[#allocation2] sm:$0xff] 0.0
    %17 = vst [vmem:[#allocation2 + $0x8] sm:$0xff] 0.0
    %18 = vst [vmem:[#allocation3] sm:$0xff] 0.0
    %19 = vst [vmem:[#allocation3 + $0x8] sm:$0xff] 0.0
  $region13: #{lstm_model_forward.4} parent=0 // pred_fallthru
    _
  %v20 = vld [vmem:[%s1] sm:$0xff]
  %v21 = vld [vmem:[%s1 + $0x8] sm:$0xff]
  %v22 = vld [vmem:[%s1 + $0x10] sm:$0xff]
  %v23 = vld [vmem:[%s1 + $0x18] sm:$0xff]
  %v24 = vld [vmem:[%s1 + $0x20] sm:$0xff]
  %v25 = vld [vmem:[%s1 + $0x28] sm:$0xff]
  %v26 = vld [vmem:[%s1 + $0x30] sm:$0xff]
  %v27 = vld [vmem:[%s1 + $0x38] sm:$0xff]
  %v28 = vld [vmem:[%s1 + $0x40] sm:$0xff]
  %v29 = vld [vmem:[%s1 + $0x48] sm:$0xff]
  %v30 = vld [vmem:[%s1 + $0x50] sm:$0xff]
  %v31 = vld [vmem:[%s1 + $0x58] sm:$0xff]
  %v32 = vld [vmem:[%s1 + $0x60] sm:$0xff]
  %v33 = vld [vmem:[%s1 + $0x68] sm:$0xff]
  %v34 = vld [vmem:[%s1 + $0x70] sm:$0xff]
  %v35 = vld [vmem:[%s1 + $0x78] sm:$0xff]
  %v36 = vld [vmem:[%s1 + $0x80] sm:$0xff]
  %v37 = vld [vmem:[%s1 + $0x88] sm:$0xff]
  %v38 = vld [vmem:[%s1 + $0x90] sm:$0xff]
  %v39 = vld [vmem:[%s1 + $0x98] sm:$0xff]
  %v40 = vld [vmem:[%s1 + $0xa0] sm:$0xff]
  %v41 = vld [vmem:[%s1 + $0xa8] sm:$0xff]
  %v42 = vld [vmem:[%s1 + $0xb0] sm:$0xff]
  %v43 = vld [vmem:[%s1 + $0xb8] sm:$0xff]
  %v44 = vld [vmem:[%s1 + $0xc0] sm:$0xff]
  %v45 = vld [vmem:[%s1 + $0xc8] sm:$0xff]
  %v46 = vld [vmem:[%s1 + $0xd0] sm:$0xff]
  %v47 = vld [vmem:[%s1 + $0xd8] sm:$0xff]
  %v48 = vld [vmem:[%s1 + $0xe0] sm:$0xff]
  %v49 = vld [vmem:[%s1 + $0xe8] sm:$0xff]
  %v50 = vld [vmem:[%s1 + $0xf0] sm:$0xff]
  %v51 = vld [vmem:[%s1 + $0xf8] sm:$0xff]
  %v52 = vld [vmem:[#allocation2] sm:$0xff]
  %v53 = vld [vmem:[#allocation2 + $0x8] sm:$0xff]
  %v54 = vld [vmem:[#allocation3] sm:$0xff]
  %v55 = vld [vmem:[#allocation3 + $0x8] sm:$0xff]
  %v56 = vld [vmem:[%s0] sm:$0xff]
  %v57 = vld [vmem:[%s0 + $0x8] sm:$0xff]
  %v58 = vld [vmem:[%s0 + $0x10] sm:$0xff]
  %v59 = vld [vmem:[%s0 + $0x18] sm:$0xff]
  %v60 = vld [vmem:[%s0 + $0x20] sm:$0xff]
  %v61 = vld [vmem:[%s0 + $0x28] sm:$0xff]
  %v62 = vld [vmem:[%s0 + $0x30] sm:$0xff]
  %v63 = vld [vmem:[%s0 + $0x38] sm:$0xff]
  %v64 = vpack.c.bf16 %v53, %v52
  %v97 = vunpack.c.l.b16 %v20
  %v98 = vunpack.c.h.b16 %v20
  %v99 = vunpack.c.l.b16 %v21
  %v100 = vunpack.c.h.b16 %v21
  %v101 = vunpack.c.l.b16 %v22
  %v102 = vunpack.c.h.b16 %v22
  %v103 = vunpack.c.l.b16 %v23
  %v104 = vunpack.c.h.b16 %v23
  %v105 = vunpack.c.l.b16 %v24
  %v106 = vunpack.c.h.b16 %v24
  %v107 = vunpack.c.l.b16 %v25
  %v108 = vunpack.c.h.b16 %v25
  %v109 = vunpack.c.l.b16 %v26
  %v110 = vunpack.c.h.b16 %v26
  %v111 = vunpack.c.l.b16 %v27
  %v112 = vunpack.c.h.b16 %v27
  %v113 = vunpack.c.l.b16 %v28
  %v114 = vunpack.c.h.b16 %v28
  %v115 = vunpack.c.l.b16 %v29
  %v116 = vunpack.c.h.b16 %v29
  %v117 = vunpack.c.l.b16 %v30
  %v118 = vunpack.c.h.b16 %v30
  %v119 = vunpack.c.l.b16 %v31
  %v120 = vunpack.c.h.b16 %v31
  %v121 = vunpack.c.l.b16 %v32
  %v122 = vunpack.c.h.b16 %v32
  %v123 = vunpack.c.l.b16 %v33
  %v124 = vunpack.c.h.b16 %v33
  %v125 = vunpack.c.l.b16 %v34
  %v126 = vunpack.c.h.b16 %v34
  %v127 = vunpack.c.l.b16 %v35
  %v128 = vunpack.c.h.b16 %v35
  %v129 = vunpack.c.l.b16 %v36
  %v130 = vunpack.c.h.b16 %v36
  %v131 = vunpack.c.l.b16 %v37
  %v132 = vunpack.c.h.b16 %v37
  %v133 = vunpack.c.l.b16 %v38
  %v134 = vunpack.c.h.b16 %v38
  %v135 = vunpack.c.l.b16 %v39
  %v136 = vunpack.c.h.b16 %v39
  %v137 = vunpack.c.l.b16 %v40
  %v138 = vunpack.c.h.b16 %v40
  %v139 = vunpack.c.l.b16 %v41
  %v140 = vunpack.c.h.b16 %v41
  %v141 = vunpack.c.l.b16 %v42
  %v142 = vunpack.c.h.b16 %v42
  %v143 = vunpack.c.l.b16 %v43
  %v144 = vunpack.c.h.b16 %v43
  %v145 = vunpack.c.l.b16 %v44
  %v146 = vunpack.c.h.b16 %v44
  %v147 = vunpack.c.l.b16 %v45
  %v148 = vunpack.c.h.b16 %v45
  %v149 = vunpack.c.l.b16 %v46
  %v150 = vunpack.c.h.b16 %v46
  %v151 = vunpack.c.l.b16 %v47
  %v152 = vunpack.c.h.b16 %v47
  %v153 = vunpack.c.l.b16 %v48
  %v154 = vunpack.c.h.b16 %v48
  %v155 = vunpack.c.l.b16 %v49
  %v156 = vunpack.c.h.b16 %v49
  %v157 = vunpack.c.l.b16 %v50
  %v158 = vunpack.c.h.b16 %v50
  %v159 = vunpack.c.l.b16 %v51
  %v160 = vunpack.c.h.b16 %v51
  %v161 = vpack.c.b16 %v101, %v97
  %v162 = vpack.c.b16 %v102, %v98
  %v163 = vpack.c.b16 %v103, %v99
  %v164 = vpack.c.b16 %v104, %v100
  %v165 = vpack.c.b16 %v109, %v105
  %v166 = vpack.c.b16 %v110, %v106
  %v167 = vpack.c.b16 %v111, %v107
  %v168 = vpack.c.b16 %v112, %v108
  %v169 = vpack.c.b16 %v117, %v113
  %v170 = vpack.c.b16 %v118, %v114
  %v171 = vpack.c.b16 %v119, %v115
  %v172 = vpack.c.b16 %v120, %v116
  %v173 = vpack.c.b16 %v125, %v121
  %v174 = vpack.c.b16 %v126, %v122
  %v175 = vpack.c.b16 %v127, %v123
  %v176 = vpack.c.b16 %v128, %v124
  %v177 = vpack.c.b16 %v133, %v129
  %v178 = vpack.c.b16 %v134, %v130
  %v179 = vpack.c.b16 %v135, %v131
  %v180 = vpack.c.b16 %v136, %v132
  %v181 = vpack.c.b16 %v141, %v137
  %v182 = vpack.c.b16 %v142, %v138
  %v183 = vpack.c.b16 %v143, %v139
  %v184 = vpack.c.b16 %v144, %v140
  %v185 = vpack.c.b16 %v149, %v145
  %v186 = vpack.c.b16 %v150, %v146
  %v187 = vpack.c.b16 %v151, %v147
  %v188 = vpack.c.b16 %v152, %v148
  %v189 = vpack.c.b16 %v157, %v153
  %v190 = vpack.c.b16 %v158, %v154
  %v191 = vpack.c.b16 %v159, %v155
  %v192 = vpack.c.b16 %v160, %v156
  %225 = vmatprep.subr.bf16.mxu0 %v162
  %226 = vmatpush1.bf16.msra.mxu0 %v161
  %227 = vmatprep.subr.bf16.mxu0 %v166
  %228 = vmatpush1.bf16.msra.mxu0 %v165
  %229 = vmatprep.subr.bf16.mxu0 %v170
  %230 = vmatpush1.bf16.msra.mxu0 %v169
  %231 = vmatprep.subr.bf16.mxu0 %v174
  %232 = vmatpush1.bf16.msra.mxu0 %v173
  %233 = vmatprep.subr.bf16.mxu0 %v178
  %234 = vmatpush1.bf16.msra.mxu0 %v177
  %235 = vmatprep.subr.bf16.mxu0 %v182
  %236 = vmatpush1.bf16.msra.mxu0 %v181
  %237 = vmatprep.subr.bf16.mxu0 %v186
  %238 = vmatpush1.bf16.msra.mxu0 %v185
  %239 = vmatprep.subr.bf16.mxu0 %v190
  %240 = vmatpush1.bf16.msra.mxu0 %v189
  %241 = vmatprep.subr.bf16.mxu0 0
  %242 = vmatpush1.bf16.msra.mxu0 0
  %243 = vmatprep.subr.bf16.mxu0 0
  %244 = vmatpush1.bf16.msra.mxu0 0
  %245 = vmatprep.subr.bf16.mxu0 0
  %246 = vmatpush1.bf16.msra.mxu0 0
  %247 = vmatprep.subr.bf16.mxu0 0
  %248 = vmatpush1.bf16.msra.mxu0 0
  %249 = vmatprep.subr.bf16.mxu0 0
  %250 = vmatpush1.bf16.msra.mxu0 0
  %251 = vmatprep.subr.bf16.mxu0 0
  %252 = vmatpush1.bf16.msra.mxu0 0
  %253 = vmatprep.subr.bf16.mxu0 0
  %254 = vmatpush1.bf16.msra.mxu0 0
  %255 = vmatprep.subr.bf16.mxu0 0
  %256 = vmatpush1.bf16.msra.mxu0 0
  %257 = vmatprep.mubr.bf16.mxu0 0
  %258 = vmatmul.mubr.bf16.gmra.mrb[0].mxu0 %v64
  %v259 = vpop.f32.mrb[0].mxu0
  %v260 = vadd.f32 0.0, %v259
  %v261 = vpop.f32.mrb[0].mxu0
  %v262 = vadd.f32 0.0, %v261
  %v263 = vpop.f32.mrb[0].mxu0
  %v264 = vadd.f32 0.0, %v263
  %v265 = vpop.f32.mrb[0].mxu0
  %v266 = vadd.f32 0.0, %v265
  %267 = vdwg.mxu0
  %268 = vmatprep.subr.bf16.mxu0 %v164
  %269 = vmatpush1.bf16.msra.mxu0 %v163
  %270 = vmatprep.subr.bf16.mxu0 %v168
  %271 = vmatpush1.bf16.msra.mxu0 %v167
  %272 = vmatprep.subr.bf16.mxu0 %v172
  %273 = vmatpush1.bf16.msra.mxu0 %v171
  %274 = vmatprep.subr.bf16.mxu0 %v176
  %275 = vmatpush1.bf16.msra.mxu0 %v175
  %276 = vmatprep.subr.bf16.mxu0 %v180
  %277 = vmatpush1.bf16.msra.mxu0 %v179
  %278 = vmatprep.subr.bf16.mxu0 %v184
  %279 = vmatpush1.bf16.msra.mxu0 %v183
  %280 = vmatprep.subr.bf16.mxu0 %v188
  %281 = vmatpush1.bf16.msra.mxu0 %v187
  %282 = vmatprep.subr.bf16.mxu0 %v192
  %283 = vmatpush1.bf16.msra.mxu0 %v191
  %284 = vmatprep.subr.bf16.mxu0 0
  %285 = vmatpush1.bf16.msra.mxu0 0
  %286 = vmatprep.subr.bf16.mxu0 0
  %287 = vmatpush1.bf16.msra.mxu0 0
  %288 = vmatprep.subr.bf16.mxu0 0
  %289 = vmatpush1.bf16.msra.mxu0 0
  %290 = vmatprep.subr.bf16.mxu0 0
  %291 = vmatpush1.bf16.msra.mxu0 0
  %292 = vmatprep.subr.bf16.mxu0 0
  %293 = vmatpush1.bf16.msra.mxu0 0
  %294 = vmatprep.subr.bf16.mxu0 0
  %295 = vmatpush1.bf16.msra.mxu0 0
  %296 = vmatprep.subr.bf16.mxu0 0
  %297 = vmatpush1.bf16.msra.mxu0 0
  %298 = vmatprep.subr.bf16.mxu0 0
  %299 = vmatpush1.bf16.msra.mxu0 0
  %300 = vmatprep.mubr.bf16.mxu0 0
  %301 = vmatmul.mubr.bf16.gmra.mrb[0].mxu0 %v64
  %v302 = vpop.f32.mrb[0].mxu0
  %v303 = vadd.f32 0.0, %v302
  %v304 = vpop.f32.mrb[0].mxu0
  %v305 = vadd.f32 0.0, %v304
  %v306 = vpop.f32.mrb[0].mxu0
  %v307 = vadd.f32 0.0, %v306
  %v308 = vpop.f32.mrb[0].mxu0
  %v309 = vadd.f32 0.0, %v308
  %310 = vdwg.mxu0
  %v311 = vadd.f32 %v56, %v260
  %v312 = vadd.f32 %v57, %v262
  %v313 = vadd.f32 %v58, %v303
  %v314 = vadd.f32 %v59, %v305
  %v315 = vadd.f32 %v60, %v264
  %v316 = vadd.f32 %v61, %v266
  %v317 = vadd.f32 %v62, %v307
  %v318 = vadd.f32 %v63, %v309
  %v319 = vxor.u32 %v311, 2147483648
  %v320 = vxor.u32 %v315, 2147483648
  %v321 = vmul.f32 %v319, 1.442695
  %v322 = vpow.pop %v321
  %v323 = vmul.f32 %v320, 1.442695
  %v324 = vpow.pop %v323
  %v325 = vadd.f32 %v322, 1.0
  %v326 = vadd.f32 %v324, 1.0
  %v327 = vrcp.pop %v325
  %v328 = vmul.f32 1.0, %v327
  %v329 = vrcp.pop %v326
  %v330 = vmul.f32 1.0, %v329
  %v331 = vxor.u32 %v312, 2147483648
  %v332 = vxor.u32 %v316, 2147483648
  %v333 = vmul.f32 %v331, 1.442695
  %v334 = vpow.pop %v333
  %v335 = vmul.f32 %v332, 1.442695
  %v336 = vpow.pop %v335
  %v337 = vadd.f32 %v334, 1.0
  %v338 = vadd.f32 %v336, 1.0
  %v339 = vrcp.pop %v337
  %v340 = vmul.f32 1.0, %v339
  %v341 = vrcp.pop %v338
  %v342 = vmul.f32 1.0, %v341
  %v343 = vtanh.pop %v313
  %v344 = vtanh.pop %v317
  %v345 = vxor.u32 %v314, 2147483648
  %v346 = vxor.u32 %v318, 2147483648
  %v347 = vmul.f32 %v345, 1.442695
  %v348 = vpow.pop %v347
  %v349 = vmul.f32 %v346, 1.442695
  %v350 = vpow.pop %v349
  %v351 = vadd.f32 %v348, 1.0
  %v352 = vadd.f32 %v350, 1.0
  %v353 = vrcp.pop %v351
  %v354 = vmul.f32 1.0, %v353
  %v355 = vrcp.pop %v352
  %v356 = vmul.f32 1.0, %v355
  %v357 = vmul.f32 %v340, %v54
  %v358 = vmul.f32 %v342, %v55
  %v359 = vmul.f32 %v328, %v343
  %v360 = vmul.f32 %v330, %v344
  %v361 = vadd.f32 %v357, %v359
  %v362 = vadd.f32 %v358, %v360
  %v363 = vtanh.pop %v361
  %v364 = vtanh.pop %v362
  %v365 = vmul.f32 %v354, %v363
  %v366 = vmul.f32 %v356, %v364
  %v367 = vpack.c.bf16 %v366, %v365
  %v369 = vunpack.c.l.b16 %v367
  %v370 = vunpack.c.h.b16 %v367
  %v371 = vpack.c.b16 %v369, %v369
  %v372 = vpack.c.b16 %v370, %v370
  %375 = vst [vmem:[%s2] sm:$0xf] %v371
  %376 = vst [vmem:[%s2 + $0x4] sm:$0xf] %v372
  %s377 = scalar_lea.vmem %s0, 64
  %v378 = vld [vmem:[%s377] sm:$0xff]
  %v379 = vld [vmem:[%s377 + $0x8] sm:$0xff]
  %v380 = vld [vmem:[%s377 + $0x10] sm:$0xff]
  %v381 = vld [vmem:[%s377 + $0x18] sm:$0xff]
  %v382 = vld [vmem:[%s377 + $0x20] sm:$0xff]
  %v383 = vld [vmem:[%s377 + $0x28] sm:$0xff]
  %v384 = vld [vmem:[%s377 + $0x30] sm:$0xff]
  %v385 = vld [vmem:[%s377 + $0x38] sm:$0xff]
  %386 = vmatprep.subr.bf16.mxu0 %v162
  %387 = vmatpush1.bf16.msra.mxu0 %v161
  %388 = vmatprep.subr.bf16.mxu0 %v166
  %389 = vmatpush1.bf16.msra.mxu0 %v165
  %390 = vmatprep.subr.bf16.mxu0 %v170
  %391 = vmatpush1.bf16.msra.mxu0 %v169
  %392 = vmatprep.subr.bf16.mxu0 %v174
  %393 = vmatpush1.bf16.msra.mxu0 %v173
  %394 = vmatprep.subr.bf16.mxu0 %v178
  %395 = vmatpush1.bf16.msra.mxu0 %v177
  %396 = vmatprep.subr.bf16.mxu0 %v182
  %397 = vmatpush1.bf16.msra.mxu0 %v181
  %398 = vmatprep.subr.bf16.mxu0 %v186
  %399 = vmatpush1.bf16.msra.mxu0 %v185
  %400 = vmatprep.subr.bf16.mxu0 %v190
  %401 = vmatpush1.bf16.msra.mxu0 %v189
  %402 = vmatprep.subr.bf16.mxu0 0
  %403 = vmatpush1.bf16.msra.mxu0 0
  %404 = vmatprep.subr.bf16.mxu0 0
  %405 = vmatpush1.bf16.msra.mxu0 0
  %406 = vmatprep.subr.bf16.mxu0 0
  %407 = vmatpush1.bf16.msra.mxu0 0
  %408 = vmatprep.subr.bf16.mxu0 0
  %409 = vmatpush1.bf16.msra.mxu0 0
  %410 = vmatprep.subr.bf16.mxu0 0
  %411 = vmatpush1.bf16.msra.mxu0 0
  %412 = vmatprep.subr.bf16.mxu0 0
  %413 = vmatpush1.bf16.msra.mxu0 0
  %414 = vmatprep.subr.bf16.mxu0 0
  %415 = vmatpush1.bf16.msra.mxu0 0
  %416 = vmatprep.subr.bf16.mxu0 0
  %417 = vmatpush1.bf16.msra.mxu0 0
  %418 = vmatprep.mubr.bf16.mxu0 0
  %419 = vmatmul.mubr.bf16.gmra.mrb[0].mxu0 %v367
  %v420 = vpop.f32.mrb[0].mxu0
  %v421 = vadd.f32 0.0, %v420
  %v422 = vpop.f32.mrb[0].mxu0
  %v423 = vadd.f32 0.0, %v422
  %v424 = vpop.f32.mrb[0].mxu0
  %v425 = vadd.f32 0.0, %v424
  %v426 = vpop.f32.mrb[0].mxu0
  %v427 = vadd.f32 0.0, %v426
  %428 = vdwg.mxu0
  %429 = vmatprep.subr.bf16.mxu0 %v164
  %430 = vmatpush1.bf16.msra.mxu0 %v163
  %431 = vmatprep.subr.bf16.mxu0 %v168
  %432 = vmatpush1.bf16.msra.mxu0 %v167
  %433 = vmatprep.subr.bf16.mxu0 %v172
  %434 = vmatpush1.bf16.msra.mxu0 %v171
  %435 = vmatprep.subr.bf16.mxu0 %v176
  %436 = vmatpush1.bf16.msra.mxu0 %v175
  %437 = vmatprep.subr.bf16.mxu0 %v180
  %438 = vmatpush1.bf16.msra.mxu0 %v179
  %439 = vmatprep.subr.bf16.mxu0 %v184
  %440 = vmatpush1.bf16.msra.mxu0 %v183
  %441 = vmatprep.subr.bf16.mxu0 %v188
  %442 = vmatpush1.bf16.msra.mxu0 %v187
  %443 = vmatprep.subr.bf16.mxu0 %v192
  %444 = vmatpush1.bf16.msra.mxu0 %v191
  %445 = vmatprep.subr.bf16.mxu0 0
  %446 = vmatpush1.bf16.msra.mxu0 0
  %447 = vmatprep.subr.bf16.mxu0 0
  %448 = vmatpush1.bf16.msra.mxu0 0
  %449 = vmatprep.subr.bf16.mxu0 0
  %450 = vmatpush1.bf16.msra.mxu0 0
  %451 = vmatprep.subr.bf16.mxu0 0
  %452 = vmatpush1.bf16.msra.mxu0 0
  %453 = vmatprep.subr.bf16.mxu0 0
  %454 = vmatpush1.bf16.msra.mxu0 0
  %455 = vmatprep.subr.bf16.mxu0 0
  %456 = vmatpush1.bf16.msra.mxu0 0
  %457 = vmatprep.subr.bf16.mxu0 0
  %458 = vmatpush1.bf16.msra.mxu0 0
  %459 = vmatprep.subr.bf16.mxu0 0
  %460 = vmatpush1.bf16.msra.mxu0 0
  %461 = vmatprep.mubr.bf16.mxu0 0
  %462 = vmatmul.mubr.bf16.gmra.mrb[0].mxu0 %v367
  %v463 = vpop.f32.mrb[0].mxu0
  %v464 = vadd.f32 0.0, %v463
  %v465 = vpop.f32.mrb[0].mxu0
  %v466 = vadd.f32 0.0, %v465
  %v467 = vpop.f32.mrb[0].mxu0
  %v468 = vadd.f32 0.0, %v467
  %v469 = vpop.f32.mrb[0].mxu0
  %v470 = vadd.f32 0.0, %v469
  %471 = vdwg.mxu0
  %v472 = vadd.f32 %v378, %v421
  %v473 = vadd.f32 %v379, %v423
  %v474 = vadd.f32 %v380, %v464
  %v475 = vadd.f32 %v381, %v466
  %v476 = vadd.f32 %v382, %v425
  %v477 = vadd.f32 %v383, %v427
  %v478 = vadd.f32 %v384, %v468
  %v479 = vadd.f32 %v385, %v470
  %v480 = vxor.u32 %v472, 2147483648
  %v481 = vxor.u32 %v476, 2147483648
  %v482 = vmul.f32 %v480, 1.442695
  %v483 = vpow.pop %v482
  %v484 = vmul.f32 %v481, 1.442695
  %v485 = vpow.pop %v484
  %v486 = vadd.f32 %v483, 1.0
  %v487 = vadd.f32 %v485, 1.0
  %v488 = vrcp.pop %v486
  %v489 = vmul.f32 1.0, %v488
  %v490 = vrcp.pop %v487
  %v491 = vmul.f32 1.0, %v490
  %v492 = vxor.u32 %v473, 2147483648
  %v493 = vxor.u32 %v477, 2147483648
  %v494 = vmul.f32 %v492, 1.442695
  %v495 = vpow.pop %v494
  %v496 = vmul.f32 %v493, 1.442695
  %v497 = vpow.pop %v496
  %v498 = vadd.f32 %v495, 1.0
  %v499 = vadd.f32 %v497, 1.0
  %v500 = vrcp.pop %v498
  %v501 = vmul.f32 1.0, %v500
  %v502 = vrcp.pop %v499
  %v503 = vmul.f32 1.0, %v502
  %v504 = vtanh.pop %v474
  %v505 = vtanh.pop %v478
  %v506 = vxor.u32 %v475, 2147483648
  %v507 = vxor.u32 %v479, 2147483648
  %v508 = vmul.f32 %v506, 1.442695
  %v509 = vpow.pop %v508
  %v510 = vmul.f32 %v507, 1.442695
  %v511 = vpow.pop %v510
  %v512 = vadd.f32 %v509, 1.0
  %v513 = vadd.f32 %v511, 1.0
  %v514 = vrcp.pop %v512
  %v515 = vmul.f32 1.0, %v514
  %v516 = vrcp.pop %v513
  %v517 = vmul.f32 1.0, %v516
  %v518 = vmul.f32 %v501, %v361
  %v519 = vmul.f32 %v503, %v362
  %v520 = vmul.f32 %v489, %v504
  %v521 = vmul.f32 %v491, %v505
  %v522 = vadd.f32 %v518, %v520
  %v523 = vadd.f32 %v519, %v521
  %v524 = vtanh.pop %v522
  %v525 = vtanh.pop %v523
  %v526 = vmul.f32 %v515, %v524
  %v527 = vmul.f32 %v517, %v525
  %v528 = vpack.c.bf16 %v527, %v526
  %v530 = vunpack.c.l.b16 %v528
  %v531 = vunpack.c.h.b16 %v528
  %v532 = vpack.c.b16 %v530, %v530
  %v533 = vpack.c.b16 %v531, %v531
  %s536 = scalar_lea.vmem %s2, 8
  %537 = vst [vmem:[%s536] sm:$0xf] %v532
  %538 = vst [vmem:[%s536 + $0x4] sm:$0xf] %v533
  %s539 = scalar_lea.vmem %s0, 128
  %v540 = vld [vmem:[%s539] sm:$0xff]
  %v541 = vld [vmem:[%s539 + $0x8] sm:$0xff]
  %v542 = vld [vmem:[%s539 + $0x10] sm:$0xff]
  %v543 = vld [vmem:[%s539 + $0x18] sm:$0xff]
  %v544 = vld [vmem:[%s539 + $0x20] sm:$0xff]
  %v545 = vld [vmem:[%s539 + $0x28] sm:$0xff]
  %v546 = vld [vmem:[%s539 + $0x30] sm:$0xff]
  %v547 = vld [vmem:[%s539 + $0x38] sm:$0xff]
  %548 = vmatprep.subr.bf16.mxu0 %v162
  %549 = vmatpush1.bf16.msra.mxu0 %v161
  %550 = vmatprep.subr.bf16.mxu0 %v166
  %551 = vmatpush1.bf16.msra.mxu0 %v165
  %552 = vmatprep.subr.bf16.mxu0 %v170
  %553 = vmatpush1.bf16.msra.mxu0 %v169
  %554 = vmatprep.subr.bf16.mxu0 %v174
  %555 = vmatpush1.bf16.msra.mxu0 %v173
  %556 = vmatprep.subr.bf16.mxu0 %v178
  %557 = vmatpush1.bf16.msra.mxu0 %v177
  %558 = vmatprep.subr.bf16.mxu0 %v182
  %559 = vmatpush1.bf16.msra.mxu0 %v181
  %560 = vmatprep.subr.bf16.mxu0 %v186
  %561 = vmatpush1.bf16.msra.mxu0 %v185
  %562 = vmatprep.subr.bf16.mxu0 %v190
  %563 = vmatpush1.bf16.msra.mxu0 %v189
  %564 = vmatprep.subr.bf16.mxu0 0
  %565 = vmatpush1.bf16.msra.mxu0 0
  %566 = vmatprep.subr.bf16.mxu0 0
  %567 = vmatpush1.bf16.msra.mxu0 0
  %568 = vmatprep.subr.bf16.mxu0 0
  %569 = vmatpush1.bf16.msra.mxu0 0
  %570 = vmatprep.subr.bf16.mxu0 0
  %571 = vmatpush1.bf16.msra.mxu0 0
  %572 = vmatprep.subr.bf16.mxu0 0
  %573 = vmatpush1.bf16.msra.mxu0 0
  %574 = vmatprep.subr.bf16.mxu0 0
  %575 = vmatpush1.bf16.msra.mxu0 0
  %576 = vmatprep.subr.bf16.mxu0 0
  %577 = vmatpush1.bf16.msra.mxu0 0
  %578 = vmatprep.subr.bf16.mxu0 0
  %579 = vmatpush1.bf16.msra.mxu0 0
  %580 = vmatprep.mubr.bf16.mxu0 0
  %581 = vmatmul.mubr.bf16.gmra.mrb[0].mxu0 %v528
  %v582 = vpop.f32.mrb[0].mxu0
  %v583 = vadd.f32 0.0, %v582
  %v584 = vpop.f32.mrb[0].mxu0
  %v585 = vadd.f32 0.0, %v584
  %v586 = vpop.f32.mrb[0].mxu0
  %v587 = vadd.f32 0.0, %v586
  %v588 = vpop.f32.mrb[0].mxu0
  %v589 = vadd.f32 0.0, %v588
  %590 = vdwg.mxu0
  %591 = vmatprep.subr.bf16.mxu0 %v164
  %592 = vmatpush1.bf16.msra.mxu0 %v163
  %593 = vmatprep.subr.bf16.mxu0 %v168
  %594 = vmatpush1.bf16.msra.mxu0 %v167
  %595 = vmatprep.subr.bf16.mxu0 %v172
  %596 = vmatpush1.bf16.msra.mxu0 %v171
  %597 = vmatprep.subr.bf16.mxu0 %v176
  %598 = vmatpush1.bf16.msra.mxu0 %v175
  %599 = vmatprep.subr.bf16.mxu0 %v180
  %600 = vmatpush1.bf16.msra.mxu0 %v179
  %601 = vmatprep.subr.bf16.mxu0 %v184
  %602 = vmatpush1.bf16.msra.mxu0 %v183
  %603 = vmatprep.subr.bf16.mxu0 %v188
  %604 = vmatpush1.bf16.msra.mxu0 %v187
  %605 = vmatprep.subr.bf16.mxu0 %v192
  %606 = vmatpush1.bf16.msra.mxu0 %v191
  %607 = vmatprep.subr.bf16.mxu0 0
  %608 = vmatpush1.bf16.msra.mxu0 0
  %609 = vmatprep.subr.bf16.mxu0 0
  %610 = vmatpush1.bf16.msra.mxu0 0
  %611 = vmatprep.subr.bf16.mxu0 0
  %612 = vmatpush1.bf16.msra.mxu0 0
  %613 = vmatprep.subr.bf16.mxu0 0
  %614 = vmatpush1.bf16.msra.mxu0 0
  %615 = vmatprep.subr.bf16.mxu0 0
  %616 = vmatpush1.bf16.msra.mxu0 0
  %617 = vmatprep.subr.bf16.mxu0 0
  %618 = vmatpush1.bf16.msra.mxu0 0
  %619 = vmatprep.subr.bf16.mxu0 0
  %620 = vmatpush1.bf16.msra.mxu0 0
  %621 = vmatprep.subr.bf16.mxu0 0
  %622 = vmatpush1.bf16.msra.mxu0 0
  %623 = vmatprep.mubr.bf16.mxu0 0
  %624 = vmatmul.mubr.bf16.gmra.mrb[0].mxu0 %v528
  %v625 = vpop.f32.mrb[0].mxu0
  %v626 = vadd.f32 0.0, %v625
  %v627 = vpop.f32.mrb[0].mxu0
  %v628 = vadd.f32 0.0, %v627
  %v629 = vpop.f32.mrb[0].mxu0
  %v630 = vadd.f32 0.0, %v629
  %v631 = vpop.f32.mrb[0].mxu0
  %v632 = vadd.f32 0.0, %v631
  %633 = vdwg.mxu0
  %v634 = vadd.f32 %v540, %v583
  %v635 = vadd.f32 %v541, %v585
  %v636 = vadd.f32 %v542, %v626
  %v637 = vadd.f32 %v543, %v628
  %v638 = vadd.f32 %v544, %v587
  %v639 = vadd.f32 %v545, %v589
  %v640 = vadd.f32 %v546, %v630
  %v641 = vadd.f32 %v547, %v632
  %v642 = vxor.u32 %v634, 2147483648
  %v643 = vxor.u32 %v638, 2147483648
  %v644 = vmul.f32 %v642, 1.442695
  %v645 = vpow.pop %v644
  %v646 = vmul.f32 %v643, 1.442695
  %v647 = vpow.pop %v646
  %v648 = vadd.f32 %v645, 1.0
  %v649 = vadd.f32 %v647, 1.0
  %v650 = vrcp.pop %v648
  %v651 = vmul.f32 1.0, %v650
  %v652 = vrcp.pop %v649
  %v653 = vmul.f32 1.0, %v652
  %v654 = vxor.u32 %v635, 2147483648
  %v655 = vxor.u32 %v639, 2147483648
  %v656 = vmul.f32 %v654, 1.442695
  %v657 = vpow.pop %v656
  %v658 = vmul.f32 %v655, 1.442695
  %v659 = vpow.pop %v658
  %v660 = vadd.f32 %v657, 1.0
  %v661 = vadd.f32 %v659, 1.0
  %v662 = vrcp.pop %v660
  %v663 = vmul.f32 1.0, %v662
  %v664 = vrcp.pop %v661
  %v665 = vmul.f32 1.0, %v664
  %v666 = vtanh.pop %v636
  %v667 = vtanh.pop %v640
  %v668 = vxor.u32 %v637, 2147483648
  %v669 = vxor.u32 %v641, 2147483648
  %v670 = vmul.f32 %v668, 1.442695
  %v671 = vpow.pop %v670
  %v672 = vmul.f32 %v669, 1.442695
  %v673 = vpow.pop %v672
  %v674 = vadd.f32 %v671, 1.0
  %v675 = vadd.f32 %v673, 1.0
  %v676 = vrcp.pop %v674
  %v677 = vmul.f32 1.0, %v676
  %v678 = vrcp.pop %v675
  %v679 = vmul.f32 1.0, %v678
  %v680 = vmul.f32 %v663, %v522
  %v681 = vmul.f32 %v665, %v523
  %v682 = vmul.f32 %v651, %v666
  %v683 = vmul.f32 %v653, %v667
  %v684 = vadd.f32 %v680, %v682
  %v685 = vadd.f32 %v681, %v683
  %v686 = vtanh.pop %v684
  %v687 = vtanh.pop %v685
  %v688 = vmul.f32 %v677, %v686
  %v689 = vmul.f32 %v679, %v687
  %v690 = vpack.c.bf16 %v689, %v688
  %v692 = vunpack.c.l.b16 %v690
  %v693 = vunpack.c.h.b16 %v690
  %v694 = vpack.c.b16 %v692, %v692
  %v695 = vpack.c.b16 %v693, %v693
  %s698 = scalar_lea.vmem %s2, 16
  %699 = vst [vmem:[%s698] sm:$0xf] %v694
  %700 = vst [vmem:[%s698 + $0x4] sm:$0xf] %v695
  %s701 = scalar_lea.vmem %s0, 192
  %v702 = vld [vmem:[%s701] sm:$0xff]
  %v703 = vld [vmem:[%s701 + $0x8] sm:$0xff]
  %v704 = vld [vmem:[%s701 + $0x10] sm:$0xff]
  %v705 = vld [vmem:[%s701 + $0x18] sm:$0xff]
  %v706 = vld [vmem:[%s701 + $0x20] sm:$0xff]
  %v707 = vld [vmem:[%s701 + $0x28] sm:$0xff]
  %v708 = vld [vmem:[%s701 + $0x30] sm:$0xff]
  %v709 = vld [vmem:[%s701 + $0x38] sm:$0xff]
  %710 = vmatprep.subr.bf16.mxu0 %v162
  %711 = vmatpush1.bf16.msra.mxu0 %v161
  %712 = vmatprep.subr.bf16.mxu0 %v166
  %713 = vmatpush1.bf16.msra.mxu0 %v165
  %714 = vmatprep.subr.bf16.mxu0 %v170
  %715 = vmatpush1.bf16.msra.mxu0 %v169
  %716 = vmatprep.subr.bf16.mxu0 %v174
  %717 = vmatpush1.bf16.msra.mxu0 %v173
  %718 = vmatprep.subr.bf16.mxu0 %v178
  %719 = vmatpush1.bf16.msra.mxu0 %v177
  %720 = vmatprep.subr.bf16.mxu0 %v182
  %721 = vmatpush1.bf16.msra.mxu0 %v181
  %722 = vmatprep.subr.bf16.mxu0 %v186
  %723 = vmatpush1.bf16.msra.mxu0 %v185
  %724 = vmatprep.subr.bf16.mxu0 %v190
  %725 = vmatpush1.bf16.msra.mxu0 %v189
  %726 = vmatprep.subr.bf16.mxu0 0
  %727 = vmatpush1.bf16.msra.mxu0 0
  %728 = vmatprep.subr.bf16.mxu0 0
  %729 = vmatpush1.bf16.msra.mxu0 0
  %730 = vmatprep.subr.bf16.mxu0 0
  %731 = vmatpush1.bf16.msra.mxu0 0
  %732 = vmatprep.subr.bf16.mxu0 0
  %733 = vmatpush1.bf16.msra.mxu0 0
  %734 = vmatprep.subr.bf16.mxu0 0
  %735 = vmatpush1.bf16.msra.mxu0 0
  %736 = vmatprep.subr.bf16.mxu0 0
  %737 = vmatpush1.bf16.msra.mxu0 0
  %738 = vmatprep.subr.bf16.mxu0 0
  %739 = vmatpush1.bf16.msra.mxu0 0
  %740 = vmatprep.subr.bf16.mxu0 0
  %741 = vmatpush1.bf16.msra.mxu0 0
  %742 = vmatprep.mubr.bf16.mxu0 0
  %743 = vmatmul.mubr.bf16.gmra.mrb[0].mxu0 %v690
  %v744 = vpop.f32.mrb[0].mxu0
  %v745 = vadd.f32 0.0, %v744
  %v746 = vpop.f32.mrb[0].mxu0
  %v747 = vadd.f32 0.0, %v746
  %v748 = vpop.f32.mrb[0].mxu0
  %v749 = vadd.f32 0.0, %v748
  %v750 = vpop.f32.mrb[0].mxu0
  %v751 = vadd.f32 0.0, %v750
  %752 = vdwg.mxu0
  %753 = vmatprep.subr.bf16.mxu0 %v164
  %754 = vmatpush1.bf16.msra.mxu0 %v163
  %755 = vmatprep.subr.bf16.mxu0 %v168
  %756 = vmatpush1.bf16.msra.mxu0 %v167
  %757 = vmatprep.subr.bf16.mxu0 %v172
  %758 = vmatpush1.bf16.msra.mxu0 %v171
  %759 = vmatprep.subr.bf16.mxu0 %v176
  %760 = vmatpush1.bf16.msra.mxu0 %v175
  %761 = vmatprep.subr.bf16.mxu0 %v180
  %762 = vmatpush1.bf16.msra.mxu0 %v179
  %763 = vmatprep.subr.bf16.mxu0 %v184
  %764 = vmatpush1.bf16.msra.mxu0 %v183
  %765 = vmatprep.subr.bf16.mxu0 %v188
  %766 = vmatpush1.bf16.msra.mxu0 %v187
  %767 = vmatprep.subr.bf16.mxu0 %v192
  %768 = vmatpush1.bf16.msra.mxu0 %v191
  %769 = vmatprep.subr.bf16.mxu0 0
  %770 = vmatpush1.bf16.msra.mxu0 0
  %771 = vmatprep.subr.bf16.mxu0 0
  %772 = vmatpush1.bf16.msra.mxu0 0
  %773 = vmatprep.subr.bf16.mxu0 0
  %774 = vmatpush1.bf16.msra.mxu0 0
  %775 = vmatprep.subr.bf16.mxu0 0
  %776 = vmatpush1.bf16.msra.mxu0 0
  %777 = vmatprep.subr.bf16.mxu0 0
  %778 = vmatpush1.bf16.msra.mxu0 0
  %779 = vmatprep.subr.bf16.mxu0 0
  %780 = vmatpush1.bf16.msra.mxu0 0
  %781 = vmatprep.subr.bf16.mxu0 0
  %782 = vmatpush1.bf16.msra.mxu0 0
  %783 = vmatprep.subr.bf16.mxu0 0
  %784 = vmatpush1.bf16.msra.mxu0 0
  %785 = vmatprep.mubr.bf16.mxu0 0
  %786 = vmatmul.mubr.bf16.gmra.mrb[0].mxu0 %v690
  %v787 = vpop.f32.mrb[0].mxu0
  %v788 = vadd.f32 0.0, %v787
  %v789 = vpop.f32.mrb[0].mxu0
  %v790 = vadd.f32 0.0, %v789
  %v791 = vpop.f32.mrb[0].mxu0
  %v792 = vadd.f32 0.0, %v791
  %v793 = vpop.f32.mrb[0].mxu0
  %v794 = vadd.f32 0.0, %v793
  %795 = vdwg.mxu0
  %v796 = vadd.f32 %v702, %v745
  %v797 = vadd.f32 %v703, %v747
  %v798 = vadd.f32 %v704, %v788
  %v799 = vadd.f32 %v705, %v790
  %v800 = vadd.f32 %v706, %v749
  %v801 = vadd.f32 %v707, %v751
  %v802 = vadd.f32 %v708, %v792
  %v803 = vadd.f32 %v709, %v794
  %v804 = vxor.u32 %v796, 2147483648
  %v805 = vxor.u32 %v800, 2147483648
  %v806 = vmul.f32 %v804, 1.442695
  %v807 = vpow.pop %v806
  %v808 = vmul.f32 %v805, 1.442695
  %v809 = vpow.pop %v808
  %v810 = vadd.f32 %v807, 1.0
  %v811 = vadd.f32 %v809, 1.0
  %v812 = vrcp.pop %v810
  %v813 = vmul.f32 1.0, %v812
  %v814 = vrcp.pop %v811
  %v815 = vmul.f32 1.0, %v814
  %v816 = vxor.u32 %v797, 2147483648
  %v817 = vxor.u32 %v801, 2147483648
  %v818 = vmul.f32 %v816, 1.442695
  %v819 = vpow.pop %v818
  %v820 = vmul.f32 %v817, 1.442695
  %v821 = vpow.pop %v820
  %v822 = vadd.f32 %v819, 1.0
  %v823 = vadd.f32 %v821, 1.0
  %v824 = vrcp.pop %v822
  %v825 = vmul.f32 1.0, %v824
  %v826 = vrcp.pop %v823
  %v827 = vmul.f32 1.0, %v826
  %v828 = vtanh.pop %v798
  %v829 = vtanh.pop %v802
  %v830 = vxor.u32 %v799, 2147483648
  %v831 = vxor.u32 %v803, 2147483648
  %v832 = vmul.f32 %v830, 1.442695
  %v833 = vpow.pop %v832
  %v834 = vmul.f32 %v831, 1.442695
  %v835 = vpow.pop %v834
  %v836 = vadd.f32 %v833, 1.0
  %v837 = vadd.f32 %v835, 1.0
  %v838 = vrcp.pop %v836
  %v839 = vmul.f32 1.0, %v838
  %v840 = vrcp.pop %v837
  %v841 = vmul.f32 1.0, %v840
  %v842 = vmul.f32 %v825, %v684
  %v843 = vmul.f32 %v827, %v685
  %v844 = vmul.f32 %v813, %v828
  %v845 = vmul.f32 %v815, %v829
  %v846 = vadd.f32 %v842, %v844
  %v847 = vadd.f32 %v843, %v845
  %v848 = vtanh.pop %v846
  %v849 = vtanh.pop %v847
  %v850 = vmul.f32 %v839, %v848
  %v851 = vmul.f32 %v841, %v849
  %v852 = vpack.c.bf16 %v851, %v850
  %v854 = vunpack.c.l.b16 %v852
  %v855 = vunpack.c.h.b16 %v852
  %v856 = vpack.c.b16 %v854, %v854
  %v857 = vpack.c.b16 %v855, %v855
  %s860 = scalar_lea.vmem %s2, 24
  %861 = vst [vmem:[%s860] sm:$0xf] %v856
  %862 = vst [vmem:[%s860 + $0x4] sm:$0xf] %v857
  %s863 = scalar_lea.vmem %s0, 256
  %v864 = vld [vmem:[%s863] sm:$0xff]
  %v865 = vld [vmem:[%s863 + $0x8] sm:$0xff]
  %v866 = vld [vmem:[%s863 + $0x10] sm:$0xff]
  %v867 = vld [vmem:[%s863 + $0x18] sm:$0xff]
  %v868 = vld [vmem:[%s863 + $0x20] sm:$0xff]
  %v869 = vld [vmem:[%s863 + $0x28] sm:$0xff]
  %v870 = vld [vmem:[%s863 + $0x30] sm:$0xff]
  %v871 = vld [vmem:[%s863 + $0x38] sm:$0xff]
  %872 = vmatprep.subr.bf16.mxu0 %v162
  %873 = vmatpush1.bf16.msra.mxu0 %v161
  %874 = vmatprep.subr.bf16.mxu0 %v166
  %875 = vmatpush1.bf16.msra.mxu0 %v165
  %876 = vmatprep.subr.bf16.mxu0 %v170
  %877 = vmatpush1.bf16.msra.mxu0 %v169
  %878 = vmatprep.subr.bf16.mxu0 %v174
  %879 = vmatpush1.bf16.msra.mxu0 %v173
  %880 = vmatprep.subr.bf16.mxu0 %v178
  %881 = vmatpush1.bf16.msra.mxu0 %v177
  %882 = vmatprep.subr.bf16.mxu0 %v182
  %883 = vmatpush1.bf16.msra.mxu0 %v181
  %884 = vmatprep.subr.bf16.mxu0 %v186
  %885 = vmatpush1.bf16.msra.mxu0 %v185
  %886 = vmatprep.subr.bf16.mxu0 %v190
  %887 = vmatpush1.bf16.msra.mxu0 %v189
  %888 = vmatprep.subr.bf16.mxu0 0
  %889 = vmatpush1.bf16.msra.mxu0 0
  %890 = vmatprep.subr.bf16.mxu0 0
  %891 = vmatpush1.bf16.msra.mxu0 0
  %892 = vmatprep.subr.bf16.mxu0 0
  %893 = vmatpush1.bf16.msra.mxu0 0
  %894 = vmatprep.subr.bf16.mxu0 0
  %895 = vmatpush1.bf16.msra.mxu0 0
  %896 = vmatprep.subr.bf16.mxu0 0
  %897 = vmatpush1.bf16.msra.mxu0 0
  %898 = vmatprep.subr.bf16.mxu0 0
  %899 = vmatpush1.bf16.msra.mxu0 0
  %900 = vmatprep.subr.bf16.mxu0 0
  %901 = vmatpush1.bf16.msra.mxu0 0
  %902 = vmatprep.subr.bf16.mxu0 0
  %903 = vmatpush1.bf16.msra.mxu0 0
  %904 = vmatprep.mubr.bf16.mxu0 0
  %905 = vmatmul.mubr.bf16.gmra.mrb[0].mxu0 %v852
  %v906 = vpop.f32.mrb[0].mxu0
  %v907 = vadd.f32 0.0, %v906
  %v908 = vpop.f32.mrb[0].mxu0
  %v909 = vadd.f32 0.0, %v908
  %v910 = vpop.f32.mrb[0].mxu0
  %v911 = vadd.f32 0.0, %v910
  %v912 = vpop.f32.mrb[0].mxu0
  %v913 = vadd.f32 0.0, %v912
  %914 = vdwg.mxu0
  %915 = vmatprep.subr.bf16.mxu0 %v164
  %916 = vmatpush1.bf16.msra.mxu0 %v163
  %917 = vmatprep.subr.bf16.mxu0 %v168
  %918 = vmatpush1.bf16.msra.mxu0 %v167
  %919 = vmatprep.subr.bf16.mxu0 %v172
  %920 = vmatpush1.bf16.msra.mxu0 %v171
  %921 = vmatprep.subr.bf16.mxu0 %v176
  %922 = vmatpush1.bf16.msra.mxu0 %v175
  %923 = vmatprep.subr.bf16.mxu0 %v180
  %924 = vmatpush1.bf16.msra.mxu0 %v179
  %925 = vmatprep.subr.bf16.mxu0 %v184
  %926 = vmatpush1.bf16.msra.mxu0 %v183
  %927 = vmatprep.subr.bf16.mxu0 %v188
  %928 = vmatpush1.bf16.msra.mxu0 %v187
  %929 = vmatprep.subr.bf16.mxu0 %v192
  %930 = vmatpush1.bf16.msra.mxu0 %v191
  %931 = vmatprep.subr.bf16.mxu0 0
  %932 = vmatpush1.bf16.msra.mxu0 0
  %933 = vmatprep.subr.bf16.mxu0 0
  %934 = vmatpush1.bf16.msra.mxu0 0
  %935 = vmatprep.subr.bf16.mxu0 0
  %936 = vmatpush1.bf16.msra.mxu0 0
  %937 = vmatprep.subr.bf16.mxu0 0
  %938 = vmatpush1.bf16.msra.mxu0 0
  %939 = vmatprep.subr.bf16.mxu0 0
  %940 = vmatpush1.bf16.msra.mxu0 0
  %941 = vmatprep.subr.bf16.mxu0 0
  %942 = vmatpush1.bf16.msra.mxu0 0
  %943 = vmatprep.subr.bf16.mxu0 0
  %944 = vmatpush1.bf16.msra.mxu0 0
  %945 = vmatprep.subr.bf16.mxu0 0
  %946 = vmatpush1.bf16.msra.mxu0 0
  %947 = vmatprep.mubr.bf16.mxu0 0
  %948 = vmatmul.mubr.bf16.gmra.mrb[0].mxu0 %v852
  %v949 = vpop.f32.mrb[0].mxu0
  %v950 = vadd.f32 0.0, %v949
  %v951 = vpop.f32.mrb[0].mxu0
  %v952 = vadd.f32 0.0, %v951
  %v953 = vpop.f32.mrb[0].mxu0
  %v954 = vadd.f32 0.0, %v953
  %v955 = vpop.f32.mrb[0].mxu0
  %v956 = vadd.f32 0.0, %v955
  %957 = vdwg.mxu0
  %v958 = vadd.f32 %v864, %v907
  %v959 = vadd.f32 %v865, %v909
  %v960 = vadd.f32 %v866, %v950
  %v961 = vadd.f32 %v867, %v952
  %v962 = vadd.f32 %v868, %v911
  %v963 = vadd.f32 %v869, %v913
  %v964 = vadd.f32 %v870, %v954
  %v965 = vadd.f32 %v871, %v956
  %v966 = vxor.u32 %v958, 2147483648
  %v967 = vxor.u32 %v962, 2147483648
  %v968 = vmul.f32 %v966, 1.442695
  %v969 = vpow.pop %v968
  %v970 = vmul.f32 %v967, 1.442695
  %v971 = vpow.pop %v970
  %v972 = vadd.f32 %v969, 1.0
  %v973 = vadd.f32 %v971, 1.0
  %v974 = vrcp.pop %v972
  %v975 = vmul.f32 1.0, %v974
  %v976 = vrcp.pop %v973
  %v977 = vmul.f32 1.0, %v976
  %v978 = vxor.u32 %v959, 2147483648
  %v979 = vxor.u32 %v963, 2147483648
  %v980 = vmul.f32 %v978, 1.442695
  %v981 = vpow.pop %v980
  %v982 = vmul.f32 %v979, 1.442695
  %v983 = vpow.pop %v982
  %v984 = vadd.f32 %v981, 1.0
  %v985 = vadd.f32 %v983, 1.0
  %v986 = vrcp.pop %v984
  %v987 = vmul.f32 1.0, %v986
  %v988 = vrcp.pop %v985
  %v989 = vmul.f32 1.0, %v988
  %v990 = vtanh.pop %v960
  %v991 = vtanh.pop %v964
  %v992 = vxor.u32 %v961, 2147483648
  %v993 = vxor.u32 %v965, 2147483648
  %v994 = vmul.f32 %v992, 1.442695
  %v995 = vpow.pop %v994
  %v996 = vmul.f32 %v993, 1.442695
  %v997 = vpow.pop %v996
  %v998 = vadd.f32 %v995, 1.0
  %v999 = vadd.f32 %v997, 1.0
  %v1000 = vrcp.pop %v998
  %v1001 = vmul.f32 1.0, %v1000
  %v1002 = vrcp.pop %v999
  %v1003 = vmul.f32 1.0, %v1002
  %v1004 = vmul.f32 %v987, %v846
  %v1005 = vmul.f32 %v989, %v847
  %v1006 = vmul.f32 %v975, %v990
  %v1007 = vmul.f32 %v977, %v991
  %v1008 = vadd.f32 %v1004, %v1006
  %v1009 = vadd.f32 %v1005, %v1007
  %v1010 = vtanh.pop %v1008
  %v1011 = vtanh.pop %v1009
  %v1012 = vmul.f32 %v1001, %v1010
  %v1013 = vmul.f32 %v1003, %v1011
  %v1014 = vpack.c.bf16 %v1013, %v1012
  %v1016 = vunpack.c.l.b16 %v1014
  %v1017 = vunpack.c.h.b16 %v1014
  %v1018 = vpack.c.b16 %v1016, %v1016
  %v1019 = vpack.c.b16 %v1017, %v1017
  %s1022 = scalar_lea.vmem %s2, 32
  %1023 = vst [vmem:[%s1022] sm:$0xf] %v1018
  %1024 = vst [vmem:[%s1022 + $0x4] sm:$0xf] %v1019
  %s1025 = scalar_lea.vmem %s0, 320
  %v1026 = vld [vmem:[%s1025] sm:$0xff]
  %v1027 = vld [vmem:[%s1025 + $0x8] sm:$0xff]
  %v1028 = vld [vmem:[%s1025 + $0x10] sm:$0xff]
  %v1029 = vld [vmem:[%s1025 + $0x18] sm:$0xff]
  %v1030 = vld [vmem:[%s1025 + $0x20] sm:$0xff]
  %v1031 = vld [vmem:[%s1025 + $0x28] sm:$0xff]
  %v1032 = vld [vmem:[%s1025 + $0x30] sm:$0xff]
  %v1033 = vld [vmem:[%s1025 + $0x38] sm:$0xff]
  %1034 = vmatprep.subr.bf16.mxu0 %v162
  %1035 = vmatpush1.bf16.msra.mxu0 %v161
  %1036 = vmatprep.subr.bf16.mxu0 %v166
  %1037 = vmatpush1.bf16.msra.mxu0 %v165
  %1038 = vmatprep.subr.bf16.mxu0 %v170
  %1039 = vmatpush1.bf16.msra.mxu0 %v169
  %1040 = vmatprep.subr.bf16.mxu0 %v174
  %1041 = vmatpush1.bf16.msra.mxu0 %v173
  %1042 = vmatprep.subr.bf16.mxu0 %v178
  %1043 = vmatpush1.bf16.msra.mxu0 %v177
  %1044 = vmatprep.subr.bf16.mxu0 %v182
  %1045 = vmatpush1.bf16.msra.mxu0 %v181
  %1046 = vmatprep.subr.bf16.mxu0 %v186
  %1047 = vmatpush1.bf16.msra.mxu0 %v185
  %1048 = vmatprep.subr.bf16.mxu0 %v190
  %1049 = vmatpush1.bf16.msra.mxu0 %v189
  %1050 = vmatprep.subr.bf16.mxu0 0
  %1051 = vmatpush1.bf16.msra.mxu0 0
  %1052 = vmatprep.subr.bf16.mxu0 0
  %1053 = vmatpush1.bf16.msra.mxu0 0
  %1054 = vmatprep.subr.bf16.mxu0 0
  %1055 = vmatpush1.bf16.msra.mxu0 0
  %1056 = vmatprep.subr.bf16.mxu0 0
  %1057 = vmatpush1.bf16.msra.mxu0 0
  %1058 = vmatprep.subr.bf16.mxu0 0
  %1059 = vmatpush1.bf16.msra.mxu0 0
  %1060 = vmatprep.subr.bf16.mxu0 0
  %1061 = vmatpush1.bf16.msra.mxu0 0
  %1062 = vmatprep.subr.bf16.mxu0 0
  %1063 = vmatpush1.bf16.msra.mxu0 0
  %1064 = vmatprep.subr.bf16.mxu0 0
  %1065 = vmatpush1.bf16.msra.mxu0 0
  %1066 = vmatprep.mubr.bf16.mxu0 0
  %1067 = vmatmul.mubr.bf16.gmra.mrb[0].mxu0 %v1014
  %v1068 = vpop.f32.mrb[0].mxu0
  %v1069 = vadd.f32 0.0, %v1068
  %v1070 = vpop.f32.mrb[0].mxu0
  %v1071 = vadd.f32 0.0, %v1070
  %v1072 = vpop.f32.mrb[0].mxu0
  %v1073 = vadd.f32 0.0, %v1072
  %v1074 = vpop.f32.mrb[0].mxu0
  %v1075 = vadd.f32 0.0, %v1074
  %1076 = vdwg.mxu0
  %1077 = vmatprep.subr.bf16.mxu0 %v164
  %1078 = vmatpush1.bf16.msra.mxu0 %v163
  %1079 = vmatprep.subr.bf16.mxu0 %v168
  %1080 = vmatpush1.bf16.msra.mxu0 %v167
  %1081 = vmatprep.subr.bf16.mxu0 %v172
  %1082 = vmatpush1.bf16.msra.mxu0 %v171
  %1083 = vmatprep.subr.bf16.mxu0 %v176
  %1084 = vmatpush1.bf16.msra.mxu0 %v175
  %1085 = vmatprep.subr.bf16.mxu0 %v180
  %1086 = vmatpush1.bf16.msra.mxu0 %v179
  %1087 = vmatprep.subr.bf16.mxu0 %v184
  %1088 = vmatpush1.bf16.msra.mxu0 %v183
  %1089 = vmatprep.subr.bf16.mxu0 %v188
  %1090 = vmatpush1.bf16.msra.mxu0 %v187
  %1091 = vmatprep.subr.bf16.mxu0 %v192
  %1092 = vmatpush1.bf16.msra.mxu0 %v191
  %1093 = vmatprep.subr.bf16.mxu0 0
  %1094 = vmatpush1.bf16.msra.mxu0 0
  %1095 = vmatprep.subr.bf16.mxu0 0
  %1096 = vmatpush1.bf16.msra.mxu0 0
  %1097 = vmatprep.subr.bf16.mxu0 0
  %1098 = vmatpush1.bf16.msra.mxu0 0
  %1099 = vmatprep.subr.bf16.mxu0 0
  %1100 = vmatpush1.bf16.msra.mxu0 0
  %1101 = vmatprep.subr.bf16.mxu0 0
  %1102 = vmatpush1.bf16.msra.mxu0 0
  %1103 = vmatprep.subr.bf16.mxu0 0
  %1104 = vmatpush1.bf16.msra.mxu0 0
  %1105 = vmatprep.subr.bf16.mxu0 0
  %1106 = vmatpush1.bf16.msra.mxu0 0
  %1107 = vmatprep.subr.bf16.mxu0 0
  %1108 = vmatpush1.bf16.msra.mxu0 0
  %1109 = vmatprep.mubr.bf16.mxu0 0
  %1110 = vmatmul.mubr.bf16.gmra.mrb[0].mxu0 %v1014
  %v1111 = vpop.f32.mrb[0].mxu0
  %v1112 = vadd.f32 0.0, %v1111
  %v1113 = vpop.f32.mrb[0].mxu0
  %v1114 = vadd.f32 0.0, %v1113
  %v1115 = vpop.f32.mrb[0].mxu0
  %v1116 = vadd.f32 0.0, %v1115
  %v1117 = vpop.f32.mrb[0].mxu0
  %v1118 = vadd.f32 0.0, %v1117
  %1119 = vdwg.mxu0
  %v1120 = vadd.f32 %v1026, %v1069
  %v1121 = vadd.f32 %v1027, %v1071
  %v1122 = vadd.f32 %v1028, %v1112
  %v1123 = vadd.f32 %v1029, %v1114
  %v1124 = vadd.f32 %v1030, %v1073
  %v1125 = vadd.f32 %v1031, %v1075
  %v1126 = vadd.f32 %v1032, %v1116
  %v1127 = vadd.f32 %v1033, %v1118
  %v1128 = vxor.u32 %v1120, 2147483648
  %v1129 = vxor.u32 %v1124, 2147483648
  %v1130 = vmul.f32 %v1128, 1.442695
  %v1131 = vpow.pop %v1130
  %v1132 = vmul.f32 %v1129, 1.442695
  %v1133 = vpow.pop %v1132
  %v1134 = vadd.f32 %v1131, 1.0
  %v1135 = vadd.f32 %v1133, 1.0
  %v1136 = vrcp.pop %v1134
  %v1137 = vmul.f32 1.0, %v1136
  %v1138 = vrcp.pop %v1135
  %v1139 = vmul.f32 1.0, %v1138
  %v1140 = vxor.u32 %v1121, 2147483648
  %v1141 = vxor.u32 %v1125, 2147483648
  %v1142 = vmul.f32 %v1140, 1.442695
  %v1143 = vpow.pop %v1142
  %v1144 = vmul.f32 %v1141, 1.442695
  %v1145 = vpow.pop %v1144
  %v1146 = vadd.f32 %v1143, 1.0
  %v1147 = vadd.f32 %v1145, 1.0
  %v1148 = vrcp.pop %v1146
  %v1149 = vmul.f32 1.0, %v1148
  %v1150 = vrcp.pop %v1147
  %v1151 = vmul.f32 1.0, %v1150
  %v1152 = vtanh.pop %v1122
  %v1153 = vtanh.pop %v1126
  %v1154 = vxor.u32 %v1123, 2147483648
  %v1155 = vxor.u32 %v1127, 2147483648
  %v1156 = vmul.f32 %v1154, 1.442695
  %v1157 = vpow.pop %v1156
  %v1158 = vmul.f32 %v1155, 1.442695
  %v1159 = vpow.pop %v1158
  %v1160 = vadd.f32 %v1157, 1.0
  %v1161 = vadd.f32 %v1159, 1.0
  %v1162 = vrcp.pop %v1160
  %v1163 = vmul.f32 1.0, %v1162
  %v1164 = vrcp.pop %v1161
  %v1165 = vmul.f32 1.0, %v1164
  %v1166 = vmul.f32 %v1149, %v1008
  %v1167 = vmul.f32 %v1151, %v1009
  %v1168 = vmul.f32 %v1137, %v1152
  %v1169 = vmul.f32 %v1139, %v1153
  %v1170 = vadd.f32 %v1166, %v1168
  %v1171 = vadd.f32 %v1167, %v1169
  %v1172 = vtanh.pop %v1170
  %v1173 = vtanh.pop %v1171
  %v1174 = vmul.f32 %v1163, %v1172
  %v1175 = vmul.f32 %v1165, %v1173
  %v1176 = vpack.c.bf16 %v1175, %v1174
  %v1178 = vunpack.c.l.b16 %v1176
  %v1179 = vunpack.c.h.b16 %v1176
  %v1180 = vpack.c.b16 %v1178, %v1178
  %v1181 = vpack.c.b16 %v1179, %v1179
  %s1184 = scalar_lea.vmem %s2, 40
  %1185 = vst [vmem:[%s1184] sm:$0xf] %v1180
  %1186 = vst [vmem:[%s1184 + $0x4] sm:$0xf] %v1181
  %s1187 = scalar_lea.vmem %s0, 384
  %v1188 = vld [vmem:[%s1187] sm:$0xff]
  %v1189 = vld [vmem:[%s1187 + $0x8] sm:$0xff]
  %v1190 = vld [vmem:[%s1187 + $0x10] sm:$0xff]
  %v1191 = vld [vmem:[%s1187 + $0x18] sm:$0xff]
  %v1192 = vld [vmem:[%s1187 + $0x20] sm:$0xff]
  %v1193 = vld [vmem:[%s1187 + $0x28] sm:$0xff]
  %v1194 = vld [vmem:[%s1187 + $0x30] sm:$0xff]
  %v1195 = vld [vmem:[%s1187 + $0x38] sm:$0xff]
  %1196 = vmatprep.subr.bf16.mxu0 %v162
  %1197 = vmatpush1.bf16.msra.mxu0 %v161
  %1198 = vmatprep.subr.bf16.mxu0 %v166
  %1199 = vmatpush1.bf16.msra.mxu0 %v165
  %1200 = vmatprep.subr.bf16.mxu0 %v170
  %1201 = vmatpush1.bf16.msra.mxu0 %v169
  %1202 = vmatprep.subr.bf16.mxu0 %v174
  %1203 = vmatpush1.bf16.msra.mxu0 %v173
  %1204 = vmatprep.subr.bf16.mxu0 %v178
  %1205 = vmatpush1.bf16.msra.mxu0 %v177
  %1206 = vmatprep.subr.bf16.mxu0 %v182
  %1207 = vmatpush1.bf16.msra.mxu0 %v181
  %1208 = vmatprep.subr.bf16.mxu0 %v186
  %1209 = vmatpush1.bf16.msra.mxu0 %v185
  %1210 = vmatprep.subr.bf16.mxu0 %v190
  %1211 = vmatpush1.bf16.msra.mxu0 %v189
  %1212 = vmatprep.subr.bf16.mxu0 0
  %1213 = vmatpush1.bf16.msra.mxu0 0
  %1214 = vmatprep.subr.bf16.mxu0 0
  %1215 = vmatpush1.bf16.msra.mxu0 0
  %1216 = vmatprep.subr.bf16.mxu0 0
  %1217 = vmatpush1.bf16.msra.mxu0 0
  %1218 = vmatprep.subr.bf16.mxu0 0
  %1219 = vmatpush1.bf16.msra.mxu0 0
  %1220 = vmatprep.subr.bf16.mxu0 0
  %1221 = vmatpush1.bf16.msra.mxu0 0
  %1222 = vmatprep.subr.bf16.mxu0 0
  %1223 = vmatpush1.bf16.msra.mxu0 0
  %1224 = vmatprep.subr.bf16.mxu0 0
  %1225 = vmatpush1.bf16.msra.mxu0 0
  %1226 = vmatprep.subr.bf16.mxu0 0
  %1227 = vmatpush1.bf16.msra.mxu0 0
  %1228 = vmatprep.mubr.bf16.mxu0 0
  %1229 = vmatmul.mubr.bf16.gmra.mrb[0].mxu0 %v1176
  %v1230 = vpop.f32.mrb[0].mxu0
  %v1231 = vadd.f32 0.0, %v1230
  %v1232 = vpop.f32.mrb[0].mxu0
  %v1233 = vadd.f32 0.0, %v1232
  %v1234 = vpop.f32.mrb[0].mxu0
  %v1235 = vadd.f32 0.0, %v1234
  %v1236 = vpop.f32.mrb[0].mxu0
  %v1237 = vadd.f32 0.0, %v1236
  %1238 = vdwg.mxu0
  %1239 = vmatprep.subr.bf16.mxu0 %v164
  %1240 = vmatpush1.bf16.msra.mxu0 %v163
  %1241 = vmatprep.subr.bf16.mxu0 %v168
  %1242 = vmatpush1.bf16.msra.mxu0 %v167
  %1243 = vmatprep.subr.bf16.mxu0 %v172
  %1244 = vmatpush1.bf16.msra.mxu0 %v171
  %1245 = vmatprep.subr.bf16.mxu0 %v176
  %1246 = vmatpush1.bf16.msra.mxu0 %v175
  %1247 = vmatprep.subr.bf16.mxu0 %v180
  %1248 = vmatpush1.bf16.msra.mxu0 %v179
  %1249 = vmatprep.subr.bf16.mxu0 %v184
  %1250 = vmatpush1.bf16.msra.mxu0 %v183
  %1251 = vmatprep.subr.bf16.mxu0 %v188
  %1252 = vmatpush1.bf16.msra.mxu0 %v187
  %1253 = vmatprep.subr.bf16.mxu0 %v192
  %1254 = vmatpush1.bf16.msra.mxu0 %v191
  %1255 = vmatprep.subr.bf16.mxu0 0
  %1256 = vmatpush1.bf16.msra.mxu0 0
  %1257 = vmatprep.subr.bf16.mxu0 0
  %1258 = vmatpush1.bf16.msra.mxu0 0
  %1259 = vmatprep.subr.bf16.mxu0 0
  %1260 = vmatpush1.bf16.msra.mxu0 0
  %1261 = vmatprep.subr.bf16.mxu0 0
  %1262 = vmatpush1.bf16.msra.mxu0 0
  %1263 = vmatprep.subr.bf16.mxu0 0
  %1264 = vmatpush1.bf16.msra.mxu0 0
  %1265 = vmatprep.subr.bf16.mxu0 0
  %1266 = vmatpush1.bf16.msra.mxu0 0
  %1267 = vmatprep.subr.bf16.mxu0 0
  %1268 = vmatpush1.bf16.msra.mxu0 0
  %1269 = vmatprep.subr.bf16.mxu0 0
  %1270 = vmatpush1.bf16.msra.mxu0 0
  %1271 = vmatprep.mubr.bf16.mxu0 0
  %1272 = vmatmul.mubr.bf16.gmra.mrb[0].mxu0 %v1176
  %v1273 = vpop.f32.mrb[0].mxu0
  %v1274 = vadd.f32 0.0, %v1273
  %v1275 = vpop.f32.mrb[0].mxu0
  %v1276 = vadd.f32 0.0, %v1275
  %v1277 = vpop.f32.mrb[0].mxu0
  %v1278 = vadd.f32 0.0, %v1277
  %v1279 = vpop.f32.mrb[0].mxu0
  %v1280 = vadd.f32 0.0, %v1279
  %1281 = vdwg.mxu0
  %v1282 = vadd.f32 %v1188, %v1231
  %v1283 = vadd.f32 %v1189, %v1233
  %v1284 = vadd.f32 %v1190, %v1274
  %v1285 = vadd.f32 %v1191, %v1276
  %v1286 = vadd.f32 %v1192, %v1235
  %v1287 = vadd.f32 %v1193, %v1237
  %v1288 = vadd.f32 %v1194, %v1278
  %v1289 = vadd.f32 %v1195, %v1280
  %v1290 = vxor.u32 %v1282, 2147483648
  %v1291 = vxor.u32 %v1286, 2147483648
  %v1292 = vmul.f32 %v1290, 1.442695
  %v1293 = vpow.pop %v1292
  %v1294 = vmul.f32 %v1291, 1.442695
  %v1295 = vpow.pop %v1294
  %v1296 = vadd.f32 %v1293, 1.0
  %v1297 = vadd.f32 %v1295, 1.0
  %v1298 = vrcp.pop %v1296
  %v1299 = vmul.f32 1.0, %v1298
  %v1300 = vrcp.pop %v1297
  %v1301 = vmul.f32 1.0, %v1300
  %v1302 = vxor.u32 %v1283, 2147483648
  %v1303 = vxor.u32 %v1287, 2147483648
  %v1304 = vmul.f32 %v1302, 1.442695
  %v1305 = vpow.pop %v1304
  %v1306 = vmul.f32 %v1303, 1.442695
  %v1307 = vpow.pop %v1306
  %v1308 = vadd.f32 %v1305, 1.0
  %v1309 = vadd.f32 %v1307, 1.0
  %v1310 = vrcp.pop %v1308
  %v1311 = vmul.f32 1.0, %v1310
  %v1312 = vrcp.pop %v1309
  %v1313 = vmul.f32 1.0, %v1312
  %v1314 = vtanh.pop %v1284
  %v1315 = vtanh.pop %v1288
  %v1316 = vxor.u32 %v1285, 2147483648
  %v1317 = vxor.u32 %v1289, 2147483648
  %v1318 = vmul.f32 %v1316, 1.442695
  %v1319 = vpow.pop %v1318
  %v1320 = vmul.f32 %v1317, 1.442695
  %v1321 = vpow.pop %v1320
  %v1322 = vadd.f32 %v1319, 1.0
  %v1323 = vadd.f32 %v1321, 1.0
  %v1324 = vrcp.pop %v1322
  %v1325 = vmul.f32 1.0, %v1324
  %v1326 = vrcp.pop %v1323
  %v1327 = vmul.f32 1.0, %v1326
  %v1328 = vmul.f32 %v1311, %v1170
  %v1329 = vmul.f32 %v1313, %v1171
  %v1330 = vmul.f32 %v1299, %v1314
  %v1331 = vmul.f32 %v1301, %v1315
  %v1332 = vadd.f32 %v1328, %v1330
  %v1333 = vadd.f32 %v1329, %v1331
  %v1334 = vtanh.pop %v1332
  %v1335 = vtanh.pop %v1333
  %v1336 = vmul.f32 %v1325, %v1334
  %v1337 = vmul.f32 %v1327, %v1335
  %v1338 = vpack.c.bf16 %v1337, %v1336
  %v1340 = vunpack.c.l.b16 %v1338
  %v1341 = vunpack.c.h.b16 %v1338
  %v1342 = vpack.c.b16 %v1340, %v1340
  %v1343 = vpack.c.b16 %v1341, %v1341
  %s1346 = scalar_lea.vmem %s2, 48
  %1347 = vst [vmem:[%s1346] sm:$0xf] %v1342
  %1348 = vst [vmem:[%s1346 + $0x4] sm:$0xf] %v1343
  %s1349 = scalar_lea.vmem %s0, 448
  %v1350 = vld [vmem:[%s1349] sm:$0xff]
  %v1351 = vld [vmem:[%s1349 + $0x8] sm:$0xff]
  %v1352 = vld [vmem:[%s1349 + $0x10] sm:$0xff]
  %v1353 = vld [vmem:[%s1349 + $0x18] sm:$0xff]
  %v1354 = vld [vmem:[%s1349 + $0x20] sm:$0xff]
  %v1355 = vld [vmem:[%s1349 + $0x28] sm:$0xff]
  %v1356 = vld [vmem:[%s1349 + $0x30] sm:$0xff]
  %v1357 = vld [vmem:[%s1349 + $0x38] sm:$0xff]
  %1358 = vmatprep.subr.bf16.mxu0 %v162
  %1359 = vmatpush1.bf16.msra.mxu0 %v161
  %1360 = vmatprep.subr.bf16.mxu0 %v166
  %1361 = vmatpush1.bf16.msra.mxu0 %v165
  %1362 = vmatprep.subr.bf16.mxu0 %v170
  %1363 = vmatpush1.bf16.msra.mxu0 %v169
  %1364 = vmatprep.subr.bf16.mxu0 %v174
  %1365 = vmatpush1.bf16.msra.mxu0 %v173
  %1366 = vmatprep.subr.bf16.mxu0 %v178
  %1367 = vmatpush1.bf16.msra.mxu0 %v177
  %1368 = vmatprep.subr.bf16.mxu0 %v182
  %1369 = vmatpush1.bf16.msra.mxu0 %v181
  %1370 = vmatprep.subr.bf16.mxu0 %v186
  %1371 = vmatpush1.bf16.msra.mxu0 %v185
  %1372 = vmatprep.subr.bf16.mxu0 %v190
  %1373 = vmatpush1.bf16.msra.mxu0 %v189
  %1374 = vmatprep.subr.bf16.mxu0 0
  %1375 = vmatpush1.bf16.msra.mxu0 0
  %1376 = vmatprep.subr.bf16.mxu0 0
  %1377 = vmatpush1.bf16.msra.mxu0 0
  %1378 = vmatprep.subr.bf16.mxu0 0
  %1379 = vmatpush1.bf16.msra.mxu0 0
  %1380 = vmatprep.subr.bf16.mxu0 0
  %1381 = vmatpush1.bf16.msra.mxu0 0
  %1382 = vmatprep.subr.bf16.mxu0 0
  %1383 = vmatpush1.bf16.msra.mxu0 0
  %1384 = vmatprep.subr.bf16.mxu0 0
  %1385 = vmatpush1.bf16.msra.mxu0 0
  %1386 = vmatprep.subr.bf16.mxu0 0
  %1387 = vmatpush1.bf16.msra.mxu0 0
  %1388 = vmatprep.subr.bf16.mxu0 0
  %1389 = vmatpush1.bf16.msra.mxu0 0
  %1390 = vmatprep.mubr.bf16.mxu0 0
  %1391 = vmatmul.mubr.bf16.gmra.mrb[0].mxu0 %v1338
  %v1392 = vpop.f32.mrb[0].mxu0
  %v1393 = vadd.f32 0.0, %v1392
  %v1394 = vpop.f32.mrb[0].mxu0
  %v1395 = vadd.f32 0.0, %v1394
  %v1396 = vpop.f32.mrb[0].mxu0
  %v1397 = vadd.f32 0.0, %v1396
  %v1398 = vpop.f32.mrb[0].mxu0
  %v1399 = vadd.f32 0.0, %v1398
  %1400 = vdwg.mxu0
  %1401 = vmatprep.subr.bf16.mxu0 %v164
  %1402 = vmatpush1.bf16.msra.mxu0 %v163
  %1403 = vmatprep.subr.bf16.mxu0 %v168
  %1404 = vmatpush1.bf16.msra.mxu0 %v167
  %1405 = vmatprep.subr.bf16.mxu0 %v172
  %1406 = vmatpush1.bf16.msra.mxu0 %v171
  %1407 = vmatprep.subr.bf16.mxu0 %v176
  %1408 = vmatpush1.bf16.msra.mxu0 %v175
  %1409 = vmatprep.subr.bf16.mxu0 %v180
  %1410 = vmatpush1.bf16.msra.mxu0 %v179
  %1411 = vmatprep.subr.bf16.mxu0 %v184
  %1412 = vmatpush1.bf16.msra.mxu0 %v183
  %1413 = vmatprep.subr.bf16.mxu0 %v188
  %1414 = vmatpush1.bf16.msra.mxu0 %v187
  %1415 = vmatprep.subr.bf16.mxu0 %v192
  %1416 = vmatpush1.bf16.msra.mxu0 %v191
  %1417 = vmatprep.subr.bf16.mxu0 0
  %1418 = vmatpush1.bf16.msra.mxu0 0
  %1419 = vmatprep.subr.bf16.mxu0 0
  %1420 = vmatpush1.bf16.msra.mxu0 0
  %1421 = vmatprep.subr.bf16.mxu0 0
  %1422 = vmatpush1.bf16.msra.mxu0 0
  %1423 = vmatprep.subr.bf16.mxu0 0
  %1424 = vmatpush1.bf16.msra.mxu0 0
  %1425 = vmatprep.subr.bf16.mxu0 0
  %1426 = vmatpush1.bf16.msra.mxu0 0
  %1427 = vmatprep.subr.bf16.mxu0 0
  %1428 = vmatpush1.bf16.msra.mxu0 0
  %1429 = vmatprep.subr.bf16.mxu0 0
  %1430 = vmatpush1.bf16.msra.mxu0 0
  %1431 = vmatprep.subr.bf16.mxu0 0
  %1432 = vmatpush1.bf16.msra.mxu0 0
  %1433 = vmatprep.mubr.bf16.mxu0 0
  %1434 = vmatmul.mubr.bf16.gmra.mrb[0].mxu0 %v1338
  %v1435 = vpop.f32.mrb[0].mxu0
  %v1436 = vadd.f32 0.0, %v1435
  %v1437 = vpop.f32.mrb[0].mxu0
  %v1438 = vadd.f32 0.0, %v1437
  %v1439 = vpop.f32.mrb[0].mxu0
  %v1440 = vadd.f32 0.0, %v1439
  %v1441 = vpop.f32.mrb[0].mxu0
  %v1442 = vadd.f32 0.0, %v1441
  %1443 = vdwg.mxu0
  %v1444 = vadd.f32 %v1350, %v1393
  %v1445 = vadd.f32 %v1351, %v1395
  %v1446 = vadd.f32 %v1352, %v1436
  %v1447 = vadd.f32 %v1353, %v1438
  %v1448 = vadd.f32 %v1354, %v1397
  %v1449 = vadd.f32 %v1355, %v1399
  %v1450 = vadd.f32 %v1356, %v1440
  %v1451 = vadd.f32 %v1357, %v1442
  %v1452 = vxor.u32 %v1444, 2147483648
  %v1453 = vxor.u32 %v1448, 2147483648
  %v1454 = vmul.f32 %v1452, 1.442695
  %v1455 = vpow.pop %v1454
  %v1456 = vmul.f32 %v1453, 1.442695
  %v1457 = vpow.pop %v1456
  %v1458 = vadd.f32 %v1455, 1.0
  %v1459 = vadd.f32 %v1457, 1.0
  %v1460 = vrcp.pop %v1458
  %v1461 = vmul.f32 1.0, %v1460
  %v1462 = vrcp.pop %v1459
  %v1463 = vmul.f32 1.0, %v1462
  %v1464 = vxor.u32 %v1445, 2147483648
  %v1465 = vxor.u32 %v1449, 2147483648
  %v1466 = vmul.f32 %v1464, 1.442695
  %v1467 = vpow.pop %v1466
  %v1468 = vmul.f32 %v1465, 1.442695
  %v1469 = vpow.pop %v1468
  %v1470 = vadd.f32 %v1467, 1.0
  %v1471 = vadd.f32 %v1469, 1.0
  %v1472 = vrcp.pop %v1470
  %v1473 = vmul.f32 1.0, %v1472
  %v1474 = vrcp.pop %v1471
  %v1475 = vmul.f32 1.0, %v1474
  %v1476 = vtanh.pop %v1446
  %v1477 = vtanh.pop %v1450
  %v1478 = vxor.u32 %v1447, 2147483648
  %v1479 = vxor.u32 %v1451, 2147483648
  %v1480 = vmul.f32 %v1478, 1.442695
  %v1481 = vpow.pop %v1480
  %v1482 = vmul.f32 %v1479, 1.442695
  %v1483 = vpow.pop %v1482
  %v1484 = vadd.f32 %v1481, 1.0
  %v1485 = vadd.f32 %v1483, 1.0
  %v1486 = vrcp.pop %v1484
  %v1487 = vmul.f32 1.0, %v1486
  %v1488 = vrcp.pop %v1485
  %v1489 = vmul.f32 1.0, %v1488
  %v1490 = vmul.f32 %v1473, %v1332
  %v1491 = vmul.f32 %v1475, %v1333
  %v1492 = vmul.f32 %v1461, %v1476
  %v1493 = vmul.f32 %v1463, %v1477
  %v1494 = vadd.f32 %v1490, %v1492
  %v1495 = vadd.f32 %v1491, %v1493
  %v1496 = vtanh.pop %v1494
  %v1497 = vtanh.pop %v1495
  %v1498 = vmul.f32 %v1487, %v1496
  %v1499 = vmul.f32 %v1489, %v1497
  %v1500 = vpack.c.bf16 %v1499, %v1498
  %v1502 = vunpack.c.l.b16 %v1500
  %v1503 = vunpack.c.h.b16 %v1500
  %v1504 = vpack.c.b16 %v1502, %v1502
  %v1505 = vpack.c.b16 %v1503, %v1503
  %s1508 = scalar_lea.vmem %s2, 56
  %1509 = vst [vmem:[%s1508] sm:$0xf] %v1504
  %1510 = vst [vmem:[%s1508 + $0x4] sm:$0xf] %v1505
  %1511 = vst [vmem:[#allocation2] sm:$0xff] %v1498
  %1512 = vst [vmem:[#allocation2 + $0x8] sm:$0xff] %v1499
  %1513 = vst [vmem:[#allocation3] sm:$0xff] %v1494
  %1514 = vst [vmem:[#allocation3 + $0x8] sm:$0xff] %v1495
  // Predicated region
  $region14: #{lstm_model_forward.4} parent=0 // pred_check
    _
  $region15: #{lstm_model_forward.4} parent=0 // pred_check_branch
    %1516 = sbr.rel (0) target = $region17
  $region16: #{lstm_model_forward.4} parent=0 // pred_region
    _
  $region17: #{lstm_model_forward.4} parent=0 // pred_fallthru
    _
  // Predicated region
  $region18: #{lstm_model_forward.4} parent=0 // pred_check
    _
  $region19: #{lstm_model_forward.4} parent=0 // pred_check_branch
    %1518 = sbr.rel (0) target = $region21
  $region20: #{lstm_model_forward.4} parent=0 // pred_region
    _
  $region21: #{lstm_model_forward.4} parent=0 // pred_fallthru
    _

</llo_original>
